<compile_context>
chip_gen: v7x
topology: tpu7x:2x2x1
jax: 0.10.0
libtpu: 0.0.40
codegen_flags: <defaults>
</compile_context>

<pallas_src>
import functools

import jax
import jax.numpy as jnp
from jax.experimental import pallas as pl
from jax.experimental.pallas import tpu as pltpu  # noqa: F401  (TPU backend)


_LANE = 128
_NEG = -1e30  # masks padded class logits out of the log-softmax


def _round_up(v, m):
    return (v + m - 1) // m * m


def _bn_train(x, gamma, beta, eps=1e-5):
    # Training-mode BatchNorm1d: per-batch mean / biased variance.
    mean = jnp.mean(x, axis=0, keepdims=True)
    var = jnp.mean((x - mean) ** 2, axis=0, keepdims=True)
    return (x - mean) * jax.lax.rsqrt(var + eps) * gamma + beta


# ---------------------------------------------------------------------------
# Fused Pallas kernel: whole GNN forward in one call
# ---------------------------------------------------------------------------

def _gnn_fused_kernel(x_ref, src_ref, dst_ref, batch_ref, vec_ref, w_ref, o_ref,
                      *, num_conv_layers, num_fc_hidden):
    # x:     [N, HP]   node features (feature dim zero-padded to 128 lanes)
    # src:   [E, 1]    int32 source-node id per edge
    # dst:   [1, E]    int32 dest-node id per edge
    # batch: [1, N]    int32 graph id per node
    # vec:   [R, HP]   packed gammas / betas / edge-embeddings / biases (one row each)
    # w:     [L, HP, HP] packed weight matrices
    n_nodes = x_ref.shape[0]
    n_edges = src_ref.shape[0]
    n_graphs = o_ref.shape[0]

    # Build gather / scatter / pool selection matrices in VMEM from the index
    # vectors (never materialised in HBM; kernel inputs are only O(E + N) int32).
    e_by_n = jax.lax.broadcasted_iota(jnp.int32, (n_edges, n_nodes), 1)
    gather = jnp.where(src_ref[...] == e_by_n, 1.0, 0.0)                 # [E, N]
    n_by_e = jax.lax.broadcasted_iota(jnp.int32, (n_nodes, n_edges), 0)
    scatter = jnp.where(dst_ref[...] == n_by_e, 1.0, 0.0)                # [N, E]
    g_by_n = jax.lax.broadcasted_iota(jnp.int32, (n_graphs, n_nodes), 0)
    pool = jnp.where(batch_ref[...] == g_by_n, 1.0, 0.0)                 # [B, N]

    h = x_ref[...]
    r, wi = 0, 0

    # ---- conv stack: BN -> GENConv-like message passing -> Linear -> ReLU ----
    for _ in range(num_conv_layers):
        gamma = vec_ref[r:r + 1, :]
        beta = vec_ref[r + 1:r + 2, :]
        eemb = vec_ref[r + 2:r + 3, :]
        bias = vec_ref[r + 3:r + 4, :]
        r += 4
        hn = _bn_train(h, gamma, beta)                                        # [N, HP]
        gathered = jnp.dot(gather, hn, preferred_element_type=jnp.float32)    # [E, HP]  x_j
        msg = jnp.maximum(gathered + eemb, 0.0) + 1e-7                        # [E, HP]
        agg = jnp.dot(scatter, msg, preferred_element_type=jnp.float32)       # [N, HP]  scatter-add
        h = jnp.dot(hn + agg, w_ref[wi], preferred_element_type=jnp.float32) + bias
        h = jnp.maximum(h, 0.0)                                               # F.relu (dropout p=0)
        wi += 1

    # ---- global_add_pool ----
    g = jnp.dot(pool, h, preferred_element_type=jnp.float32)                  # [B, HP]

    # ---- FC head: BN -> Linear -> ReLU (num_fc_layers - 1 times) ----
    for _ in range(num_fc_hidden):
        gamma = vec_ref[r:r + 1, :]
        beta = vec_ref[r + 1:r + 2, :]
        bias = vec_ref[r + 2:r + 3, :]
        r += 3
        gn = _bn_train(g, gamma, beta)
        g = jnp.maximum(
            jnp.dot(gn, w_ref[wi], preferred_element_type=jnp.float32) + bias, 0.0)
        wi += 1

    # ---- bn_hidden -> lin_class -> log_softmax (lane-dense [B, HP] store) ----
    g = _bn_train(g, vec_ref[r:r + 1, :], vec_ref[r + 1:r + 2, :])
    r += 2
    cls_bias = vec_ref[r:r + 1, :]      # padded class lanes carry -1e30 -> exp == 0
    logits = jnp.dot(g, w_ref[wi], preferred_element_type=jnp.float32) + cls_bias

    m = jnp.max(logits, axis=-1, keepdims=True)
    z = logits - m
    lse = jnp.log(jnp.sum(jnp.exp(z), axis=-1, keepdims=True))
    o_ref[...] = (z - lse).astype(o_ref.dtype)


# ---------------------------------------------------------------------------
# Parameter construction (deterministic) + forward pass
# ---------------------------------------------------------------------------

def init_params(key, num_features, hidden, num_classes,
                num_conv_layers=3, num_fc_layers=2, edge_dim=9):
    params = {"convs": [], "bns_conv": [], "lins": [], "bns_fc": []}
    hidden_in = num_features
    for _ in range(num_conv_layers):
        key, k1, k2, k3 = jax.random.split(key, 4)
        params["convs"].append({
            "w_edge": 0.1 * jax.random.normal(k1, (edge_dim, hidden_in), jnp.float32),
            "b_edge": jnp.zeros((hidden_in,), jnp.float32),
            "w": 0.1 * jax.random.normal(k2, (hidden_in, hidden), jnp.float32),
            "b": 0.01 * jax.random.normal(k3, (hidden,), jnp.float32),
        })
        params["bns_conv"].append({
            "gamma": jnp.ones((hidden_in,), jnp.float32),
            "beta": jnp.zeros((hidden_in,), jnp.float32),
        })
        hidden_in = hidden
    for _ in range(num_fc_layers - 1):
        key, k1, k2 = jax.random.split(key, 3)
        params["lins"].append({
            "w": 0.1 * jax.random.normal(k1, (hidden, hidden), jnp.float32),
            "b": 0.01 * jax.random.normal(k2, (hidden,), jnp.float32),
        })
        params["bns_fc"].append({
            "gamma": jnp.ones((hidden,), jnp.float32),
            "beta": jnp.zeros((hidden,), jnp.float32),
        })
    params["bn_hidden"] = {"gamma": jnp.ones((hidden,), jnp.float32),
                           "beta": jnp.zeros((hidden,), jnp.float32)}
    key, k1, k2 = jax.random.split(key, 3)
    params["lin_class"] = {"w": 0.1 * jax.random.normal(k1, (hidden, num_classes), jnp.float32),
                           "b": 0.01 * jax.random.normal(k2, (num_classes,), jnp.float32)}
    return params


@functools.partial(jax.jit, static_argnames=("num_graphs",))
def gnn_forward(params, x, edge_index, batch, *, num_graphs):
    n_nodes, num_features = x.shape
    num_conv_layers = len(params["convs"])
    num_fc_hidden = len(params["lins"])
    hidden = params["lin_class"]["w"].shape[0]
    num_classes = params["lin_class"]["w"].shape[1]
    hp = _round_up(max(hidden, num_features, num_classes), _LANE)   # lane-dense width

    def pad_cols(a, value=0.0):
        return jnp.pad(a, ((0, 0), (0, hp - a.shape[-1])), constant_values=value)

    def pad_vec(v, value=0.0):
        return pad_cols(jnp.asarray(v, jnp.float32).reshape(1, -1), value)

    def pad_weight(w):
        w = jnp.asarray(w, jnp.float32)
        return jnp.pad(w, ((0, hp - w.shape[0]), (0, hp - w.shape[1])))

    # ---- pack all small parameters into one vector slab + one weight slab ----
    vec_rows, w_mats = [], []
    for conv_p, bn_p in zip(params["convs"], params["bns_conv"]):
        # edge_attr == one_hot(7) for every edge (per the reference forward), so the
        # per-conv edge Linear collapses to row 7 of w_edge (+ bias).
        edge_emb = conv_p["w_edge"][7] + conv_p["b_edge"]
        vec_rows += [pad_vec(bn_p["gamma"]), pad_vec(bn_p["beta"]),
                     pad_vec(edge_emb), pad_vec(conv_p["b"])]
        w_mats.append(pad_weight(conv_p["w"]))
    for lin_p, bn_p in zip(params["lins"], params["bns_fc"]):
        vec_rows += [pad_vec(bn_p["gamma"]), pad_vec(bn_p["beta"]), pad_vec(lin_p["b"])]
        w_mats.append(pad_weight(lin_p["w"]))
    vec_rows += [pad_vec(params["bn_hidden"]["gamma"]),
                 pad_vec(params["bn_hidden"]["beta"]),
                 pad_vec(params["lin_class"]["b"], value=_NEG)]
    w_mats.append(pad_weight(params["lin_class"]["w"]))

    vec_slab = jnp.concatenate(vec_rows, axis=0)
    pad_r = _round_up(vec_slab.shape[0], 8) - vec_slab.shape[0]
    vec_slab = jnp.pad(vec_slab, ((0, pad_r), (0, 0)))                  # [R, HP]
    w_slab = jnp.stack(w_mats, axis=0)                                  # [L, HP, HP]

    x_pad = pad_cols(x.astype(jnp.float32))                             # [N, HP]
    src = edge_index[0].astype(jnp.int32).reshape(-1, 1)                # [E, 1]
    dst = edge_index[1].astype(jnp.int32).reshape(1, -1)                # [1, E]
    bat = batch.astype(jnp.int32).reshape(1, -1)                        # [1, N]

    kernel = functools.partial(_gnn_fused_kernel,
                               num_conv_layers=num_conv_layers,
                               num_fc_hidden=num_fc_hidden)

    inputs = [x_pad, src, dst, bat, vec_slab, w_slab]
    in_specs = [pl.BlockSpec(a.shape, lambda nd=a.ndim: (0,) * nd) for a in inputs]

    out_pad = pl.pallas_call(
        kernel,
        out_shape=jax.ShapeDtypeStruct((num_graphs, hp), jnp.float32),
        in_specs=in_specs,
        out_specs=pl.BlockSpec((num_graphs, hp), lambda: (0, 0)),
    )(*inputs)
    return out_pad[:, :num_classes]


# ---------------------------------------------------------------------------
# Main
# ---------------------------------------------------------------------------

if __name__ == "__main__":
    key = jax.random.PRNGKey(0)

    NUM_FEATURES = 16
    HIDDEN = 128          # module default -> hidden dim is already lane-dense
    NUM_CLASSES = 4
    NUM_NODES = 24
    NUM_EDGES = 48
    NUM_GRAPHS = 4

    key, kx, ke1, ke2 = jax.random.split(key, 4)
    x = jax.random.normal(kx, (NUM_NODES, NUM_FEATURES), jnp.float32)
    src = jax.random.randint(ke1, (NUM_EDGES,), 0, NUM_NODES, jnp.int32)
    dst = jax.random.randint(ke2, (NUM_EDGES,), 0, NUM_NODES, jnp.int32)
    edge_index = jnp.stack([src, dst], axis=0)                        # [2, E]
    batch = jnp.repeat(jnp.arange(NUM_GRAPHS, dtype=jnp.int32),
                       NUM_NODES // NUM_GRAPHS)                       # [N]

    params = init_params(key, NUM_FEATURES, HIDDEN, NUM_CLASSES,
                         num_conv_layers=3, num_fc_layers=2, edge_dim=9)

    out = gnn_forward(params, x, edge_index, batch, num_graphs=NUM_GRAPHS)
    out = jax.block_until_ready(out)

    assert out.shape == (NUM_GRAPHS, NUM_CLASSES)
    # log-softmax rows should (approximately) exponentiate-sum to 1
    assert bool(jnp.all(jnp.abs(jnp.sum(jnp.exp(out), axis=-1) - 1.0) < 1e-3))
    # finite sanity check
    assert bool(jnp.all(jnp.isfinite(out)))
    print("KERNEL_OK")
</pallas_src>

<mosaic_0001>
module attributes {stable_mosaic.version = 11 : i64} {
  func.func @_gnn_fused_kernel(%arg0: memref<24x128xf32, #tpu.memory_space<vmem>>, %arg1: memref<48x1xi32, #tpu.memory_space<vmem>>, %arg2: memref<1x48xi32, #tpu.memory_space<vmem>>, %arg3: memref<1x24xi32, #tpu.memory_space<vmem>>, %arg4: memref<24x128xf32, #tpu.memory_space<vmem>>, %arg5: memref<5x128x128xf32, #tpu.memory_space<vmem>>, %arg6: memref<4x128xf32, #tpu.memory_space<vmem>>) attributes {dimension_semantics = [], scalar_prefetch = 0 : i64, scratch_operands = 0 : i64, tpu.core_type = #tpu.core_type<tc>} {
    %0 = tpu.iota {dimensions = array<i32: 1>} : vector<48x24xi32>
    %c0 = arith.constant 0 : index
    %c0_0 = arith.constant 0 : index
    %1 = vector.load %arg1[%c0, %c0_0] : memref<48x1xi32, #tpu.memory_space<vmem>>, vector<48x1xi32>
    %2 = vector.broadcast %1 : vector<48x1xi32> to vector<48x24xi32>
    %3 = arith.cmpi eq, %2, %0 : vector<48x24xi32>
    %cst = arith.constant 1.000000e+00 : f32
    %cst_1 = arith.constant 0.000000e+00 : f32
    %4 = vector.broadcast %cst : f32 to vector<48x24xf32>
    %5 = vector.broadcast %cst_1 : f32 to vector<48x24xf32>
    %6 = arith.select %3, %4, %5 : vector<48x24xi1>, vector<48x24xf32>
    %7 = tpu.iota {dimensions = array<i32: 0>} : vector<24x48xi32>
    %c0_2 = arith.constant 0 : index
    %c0_3 = arith.constant 0 : index
    %8 = vector.load %arg2[%c0_2, %c0_3] : memref<1x48xi32, #tpu.memory_space<vmem>>, vector<1x48xi32>
    %9 = vector.broadcast %8 : vector<1x48xi32> to vector<24x48xi32>
    %10 = arith.cmpi eq, %9, %7 : vector<24x48xi32>
    %cst_4 = arith.constant 1.000000e+00 : f32
    %cst_5 = arith.constant 0.000000e+00 : f32
    %11 = vector.broadcast %cst_4 : f32 to vector<24x48xf32>
    %12 = vector.broadcast %cst_5 : f32 to vector<24x48xf32>
    %13 = arith.select %10, %11, %12 : vector<24x48xi1>, vector<24x48xf32>
    %14 = tpu.iota {dimensions = array<i32: 0>} : vector<4x24xi32>
    %c0_6 = arith.constant 0 : index
    %c0_7 = arith.constant 0 : index
    %15 = vector.load %arg3[%c0_6, %c0_7] : memref<1x24xi32, #tpu.memory_space<vmem>>, vector<1x24xi32>
    %16 = vector.broadcast %15 : vector<1x24xi32> to vector<4x24xi32>
    %17 = arith.cmpi eq, %16, %14 : vector<4x24xi32>
    %cst_8 = arith.constant 1.000000e+00 : f32
    %cst_9 = arith.constant 0.000000e+00 : f32
    %18 = vector.broadcast %cst_8 : f32 to vector<4x24xf32>
    %19 = vector.broadcast %cst_9 : f32 to vector<4x24xf32>
    %20 = arith.select %17, %18, %19 : vector<4x24xi1>, vector<4x24xf32>
    %c0_10 = arith.constant 0 : index
    %c0_11 = arith.constant 0 : index
    %21 = vector.load %arg0[%c0_10, %c0_11] : memref<24x128xf32, #tpu.memory_space<vmem>>, vector<24x128xf32>
    %c0_12 = arith.constant 0 : index
    %c0_13 = arith.constant 0 : index
    %22 = vector.load %arg4[%c0_12, %c0_13] : memref<24x128xf32, #tpu.memory_space<vmem>>, vector<1x128xf32>
    %c1 = arith.constant 1 : index
    %c0_14 = arith.constant 0 : index
    %23 = vector.load %arg4[%c1, %c0_14] : memref<24x128xf32, #tpu.memory_space<vmem>>, vector<1x128xf32>
    %c2 = arith.constant 2 : index
    %c0_15 = arith.constant 0 : index
    %24 = vector.load %arg4[%c2, %c0_15] : memref<24x128xf32, #tpu.memory_space<vmem>>, vector<1x128xf32>
    %c3 = arith.constant 3 : index
    %c0_16 = arith.constant 0 : index
    %25 = vector.load %arg4[%c3, %c0_16] : memref<24x128xf32, #tpu.memory_space<vmem>>, vector<1x128xf32>
    %cst_17 = arith.constant dense<0.000000e+00> : vector<128xf32>
    %26 = vector.multi_reduction <add>, %21, %cst_17 [0] : vector<24x128xf32> to vector<128xf32>
    %27 = vector.shape_cast %26 : vector<128xf32> to vector<1x128xf32>
    %cst_18 = arith.constant 2.400000e+01 : f32
    %28 = vector.broadcast %cst_18 : f32 to vector<1x128xf32>
    %29 = arith.divf %27, %28 : vector<1x128xf32>
    %30 = vector.broadcast %29 : vector<1x128xf32> to vector<24x128xf32>
    %31 = arith.subf %21, %30 : vector<24x128xf32>
    %32 = arith.mulf %31, %31 : vector<24x128xf32>
    %cst_19 = arith.constant dense<0.000000e+00> : vector<128xf32>
    %33 = vector.multi_reduction <add>, %32, %cst_19 [0] : vector<24x128xf32> to vector<128xf32>
    %34 = vector.shape_cast %33 : vector<128xf32> to vector<1x128xf32>
    %cst_20 = arith.constant 2.400000e+01 : f32
    %35 = vector.broadcast %cst_20 : f32 to vector<1x128xf32>
    %36 = arith.divf %34, %35 : vector<1x128xf32>
    %37 = vector.broadcast %29 : vector<1x128xf32> to vector<24x128xf32>
    %38 = arith.subf %21, %37 : vector<24x128xf32>
    %cst_21 = arith.constant 9.99999974E-6 : f32
    %39 = vector.broadcast %cst_21 : f32 to vector<1x128xf32>
    %40 = arith.addf %36, %39 : vector<1x128xf32>
    %41 = math.rsqrt %40 : vector<1x128xf32>
    %42 = vector.broadcast %41 : vector<1x128xf32> to vector<24x128xf32>
    %43 = arith.mulf %38, %42 : vector<24x128xf32>
    %44 = vector.broadcast %22 : vector<1x128xf32> to vector<24x128xf32>
    %45 = arith.mulf %43, %44 : vector<24x128xf32>
    %46 = vector.broadcast %23 : vector<1x128xf32> to vector<24x128xf32>
    %47 = arith.addf %45, %46 : vector<24x128xf32>
    %cst_22 = arith.constant dense<0.000000e+00> : vector<48x128xf32>
    %48 = tpu.matmul %6, %47, %cst_22 {dimension_numbers = #tpu.dot_dimension_numbers<[1], [0], [0], [1], [0, 0, 1, 1], [], []>} : vector<48x24xf32>, vector<24x128xf32>, vector<48x128xf32> -> vector<48x128xf32>
    %49 = vector.broadcast %24 : vector<1x128xf32> to vector<48x128xf32>
    %50 = arith.addf %48, %49 : vector<48x128xf32>
    %cst_23 = arith.constant 0.000000e+00 : f32
    %51 = vector.broadcast %cst_23 : f32 to vector<48x128xf32>
    %52 = arith.maximumf %50, %51 : vector<48x128xf32>
    %cst_24 = arith.constant 1.000000e-07 : f32
    %53 = vector.broadcast %cst_24 : f32 to vector<48x128xf32>
    %54 = arith.addf %52, %53 : vector<48x128xf32>
    %cst_25 = arith.constant dense<0.000000e+00> : vector<24x128xf32>
    %55 = tpu.matmul %13, %54, %cst_25 {dimension_numbers = #tpu.dot_dimension_numbers<[1], [0], [0], [1], [0, 0, 1, 1], [], []>} : vector<24x48xf32>, vector<48x128xf32>, vector<24x128xf32> -> vector<24x128xf32>
    %56 = arith.addf %47, %55 : vector<24x128xf32>
    %c0_26 = arith.constant 0 : index
    %c0_27 = arith.constant 0 : index
    %c0_28 = arith.constant 0 : index
    %57 = vector.load %arg5[%c0_26, %c0_27, %c0_28] : memref<5x128x128xf32, #tpu.memory_space<vmem>>, vector<1x128x128xf32>
    %58 = vector.shape_cast %57 : vector<1x128x128xf32> to vector<128x128xf32>
    %cst_29 = arith.constant dense<0.000000e+00> : vector<24x128xf32>
    %59 = tpu.matmul %56, %58, %cst_29 {dimension_numbers = #tpu.dot_dimension_numbers<[1], [0], [0], [1], [0, 0, 1, 1], [], []>} : vector<24x128xf32>, vector<128x128xf32>, vector<24x128xf32> -> vector<24x128xf32>
    %60 = vector.broadcast %25 : vector<1x128xf32> to vector<24x128xf32>
    %61 = arith.addf %59, %60 : vector<24x128xf32>
    %cst_30 = arith.constant 0.000000e+00 : f32
    %62 = vector.broadcast %cst_30 : f32 to vector<24x128xf32>
    %63 = arith.maximumf %61, %62 : vector<24x128xf32>
    %c4 = arith.constant 4 : index
    %c0_31 = arith.constant 0 : index
    %64 = vector.load %arg4[%c4, %c0_31] : memref<24x128xf32, #tpu.memory_space<vmem>>, vector<1x128xf32>
    %c5 = arith.constant 5 : index
    %c0_32 = arith.constant 0 : index
    %65 = vector.load %arg4[%c5, %c0_32] : memref<24x128xf32, #tpu.memory_space<vmem>>, vector<1x128xf32>
    %c6 = arith.constant 6 : index
    %c0_33 = arith.constant 0 : index
    %66 = vector.load %arg4[%c6, %c0_33] : memref<24x128xf32, #tpu.memory_space<vmem>>, vector<1x128xf32>
    %c7 = arith.constant 7 : index
    %c0_34 = arith.constant 0 : index
    %67 = vector.load %arg4[%c7, %c0_34] : memref<24x128xf32, #tpu.memory_space<vmem>>, vector<1x128xf32>
    %cst_35 = arith.constant dense<0.000000e+00> : vector<128xf32>
    %68 = vector.multi_reduction <add>, %63, %cst_35 [0] : vector<24x128xf32> to vector<128xf32>
    %69 = vector.shape_cast %68 : vector<128xf32> to vector<1x128xf32>
    %cst_36 = arith.constant 2.400000e+01 : f32
    %70 = vector.broadcast %cst_36 : f32 to vector<1x128xf32>
    %71 = arith.divf %69, %70 : vector<1x128xf32>
    %72 = vector.broadcast %71 : vector<1x128xf32> to vector<24x128xf32>
    %73 = arith.subf %63, %72 : vector<24x128xf32>
    %74 = arith.mulf %73, %73 : vector<24x128xf32>
    %cst_37 = arith.constant dense<0.000000e+00> : vector<128xf32>
    %75 = vector.multi_reduction <add>, %74, %cst_37 [0] : vector<24x128xf32> to vector<128xf32>
    %76 = vector.shape_cast %75 : vector<128xf32> to vector<1x128xf32>
    %cst_38 = arith.constant 2.400000e+01 : f32
    %77 = vector.broadcast %cst_38 : f32 to vector<1x128xf32>
    %78 = arith.divf %76, %77 : vector<1x128xf32>
    %79 = vector.broadcast %71 : vector<1x128xf32> to vector<24x128xf32>
    %80 = arith.subf %63, %79 : vector<24x128xf32>
    %cst_39 = arith.constant 9.99999974E-6 : f32
    %81 = vector.broadcast %cst_39 : f32 to vector<1x128xf32>
    %82 = arith.addf %78, %81 : vector<1x128xf32>
    %83 = math.rsqrt %82 : vector<1x128xf32>
    %84 = vector.broadcast %83 : vector<1x128xf32> to vector<24x128xf32>
    %85 = arith.mulf %80, %84 : vector<24x128xf32>
    %86 = vector.broadcast %64 : vector<1x128xf32> to vector<24x128xf32>
    %87 = arith.mulf %85, %86 : vector<24x128xf32>
    %88 = vector.broadcast %65 : vector<1x128xf32> to vector<24x128xf32>
    %89 = arith.addf %87, %88 : vector<24x128xf32>
    %cst_40 = arith.constant dense<0.000000e+00> : vector<48x128xf32>
    %90 = tpu.matmul %6, %89, %cst_40 {dimension_numbers = #tpu.dot_dimension_numbers<[1], [0], [0], [1], [0, 0, 1, 1], [], []>} : vector<48x24xf32>, vector<24x128xf32>, vector<48x128xf32> -> vector<48x128xf32>
    %91 = vector.broadcast %66 : vector<1x128xf32> to vector<48x128xf32>
    %92 = arith.addf %90, %91 : vector<48x128xf32>
    %cst_41 = arith.constant 0.000000e+00 : f32
    %93 = vector.broadcast %cst_41 : f32 to vector<48x128xf32>
    %94 = arith.maximumf %92, %93 : vector<48x128xf32>
    %cst_42 = arith.constant 1.000000e-07 : f32
    %95 = vector.broadcast %cst_42 : f32 to vector<48x128xf32>
    %96 = arith.addf %94, %95 : vector<48x128xf32>
    %cst_43 = arith.constant dense<0.000000e+00> : vector<24x128xf32>
    %97 = tpu.matmul %13, %96, %cst_43 {dimension_numbers = #tpu.dot_dimension_numbers<[1], [0], [0], [1], [0, 0, 1, 1], [], []>} : vector<24x48xf32>, vector<48x128xf32>, vector<24x128xf32> -> vector<24x128xf32>
    %98 = arith.addf %89, %97 : vector<24x128xf32>
    %c1_44 = arith.constant 1 : index
    %c0_45 = arith.constant 0 : index
    %c0_46 = arith.constant 0 : index
    %99 = vector.load %arg5[%c1_44, %c0_45, %c0_46] : memref<5x128x128xf32, #tpu.memory_space<vmem>>, vector<1x128x128xf32>
    %100 = vector.shape_cast %99 : vector<1x128x128xf32> to vector<128x128xf32>
    %cst_47 = arith.constant dense<0.000000e+00> : vector<24x128xf32>
    %101 = tpu.matmul %98, %100, %cst_47 {dimension_numbers = #tpu.dot_dimension_numbers<[1], [0], [0], [1], [0, 0, 1, 1], [], []>} : vector<24x128xf32>, vector<128x128xf32>, vector<24x128xf32> -> vector<24x128xf32>
    %102 = vector.broadcast %67 : vector<1x128xf32> to vector<24x128xf32>
    %103 = arith.addf %101, %102 : vector<24x128xf32>
    %cst_48 = arith.constant 0.000000e+00 : f32
    %104 = vector.broadcast %cst_48 : f32 to vector<24x128xf32>
    %105 = arith.maximumf %103, %104 : vector<24x128xf32>
    %c8 = arith.constant 8 : index
    %c0_49 = arith.constant 0 : index
    %106 = vector.load %arg4[%c8, %c0_49] : memref<24x128xf32, #tpu.memory_space<vmem>>, vector<1x128xf32>
    %c9 = arith.constant 9 : index
    %c0_50 = arith.constant 0 : index
    %107 = vector.load %arg4[%c9, %c0_50] : memref<24x128xf32, #tpu.memory_space<vmem>>, vector<1x128xf32>
    %c10 = arith.constant 10 : index
    %c0_51 = arith.constant 0 : index
    %108 = vector.load %arg4[%c10, %c0_51] : memref<24x128xf32, #tpu.memory_space<vmem>>, vector<1x128xf32>
    %c11 = arith.constant 11 : index
    %c0_52 = arith.constant 0 : index
    %109 = vector.load %arg4[%c11, %c0_52] : memref<24x128xf32, #tpu.memory_space<vmem>>, vector<1x128xf32>
    %cst_53 = arith.constant dense<0.000000e+00> : vector<128xf32>
    %110 = vector.multi_reduction <add>, %105, %cst_53 [0] : vector<24x128xf32> to vector<128xf32>
    %111 = vector.shape_cast %110 : vector<128xf32> to vector<1x128xf32>
    %cst_54 = arith.constant 2.400000e+01 : f32
    %112 = vector.broadcast %cst_54 : f32 to vector<1x128xf32>
    %113 = arith.divf %111, %112 : vector<1x128xf32>
    %114 = vector.broadcast %113 : vector<1x128xf32> to vector<24x128xf32>
    %115 = arith.subf %105, %114 : vector<24x128xf32>
    %116 = arith.mulf %115, %115 : vector<24x128xf32>
    %cst_55 = arith.constant dense<0.000000e+00> : vector<128xf32>
    %117 = vector.multi_reduction <add>, %116, %cst_55 [0] : vector<24x128xf32> to vector<128xf32>
    %118 = vector.shape_cast %117 : vector<128xf32> to vector<1x128xf32>
    %cst_56 = arith.constant 2.400000e+01 : f32
    %119 = vector.broadcast %cst_56 : f32 to vector<1x128xf32>
    %120 = arith.divf %118, %119 : vector<1x128xf32>
    %121 = vector.broadcast %113 : vector<1x128xf32> to vector<24x128xf32>
    %122 = arith.subf %105, %121 : vector<24x128xf32>
    %cst_57 = arith.constant 9.99999974E-6 : f32
    %123 = vector.broadcast %cst_57 : f32 to vector<1x128xf32>
    %124 = arith.addf %120, %123 : vector<1x128xf32>
    %125 = math.rsqrt %124 : vector<1x128xf32>
    %126 = vector.broadcast %125 : vector<1x128xf32> to vector<24x128xf32>
    %127 = arith.mulf %122, %126 : vector<24x128xf32>
    %128 = vector.broadcast %106 : vector<1x128xf32> to vector<24x128xf32>
    %129 = arith.mulf %127, %128 : vector<24x128xf32>
    %130 = vector.broadcast %107 : vector<1x128xf32> to vector<24x128xf32>
    %131 = arith.addf %129, %130 : vector<24x128xf32>
    %cst_58 = arith.constant dense<0.000000e+00> : vector<48x128xf32>
    %132 = tpu.matmul %6, %131, %cst_58 {dimension_numbers = #tpu.dot_dimension_numbers<[1], [0], [0], [1], [0, 0, 1, 1], [], []>} : vector<48x24xf32>, vector<24x128xf32>, vector<48x128xf32> -> vector<48x128xf32>
    %133 = vector.broadcast %108 : vector<1x128xf32> to vector<48x128xf32>
    %134 = arith.addf %132, %133 : vector<48x128xf32>
    %cst_59 = arith.constant 0.000000e+00 : f32
    %135 = vector.broadcast %cst_59 : f32 to vector<48x128xf32>
    %136 = arith.maximumf %134, %135 : vector<48x128xf32>
    %cst_60 = arith.constant 1.000000e-07 : f32
    %137 = vector.broadcast %cst_60 : f32 to vector<48x128xf32>
    %138 = arith.addf %136, %137 : vector<48x128xf32>
    %cst_61 = arith.constant dense<0.000000e+00> : vector<24x128xf32>
    %139 = tpu.matmul %13, %138, %cst_61 {dimension_numbers = #tpu.dot_dimension_numbers<[1], [0], [0], [1], [0, 0, 1, 1], [], []>} : vector<24x48xf32>, vector<48x128xf32>, vector<24x128xf32> -> vector<24x128xf32>
    %140 = arith.addf %131, %139 : vector<24x128xf32>
    %c2_62 = arith.constant 2 : index
    %c0_63 = arith.constant 0 : index
    %c0_64 = arith.constant 0 : index
    %141 = vector.load %arg5[%c2_62, %c0_63, %c0_64] : memref<5x128x128xf32, #tpu.memory_space<vmem>>, vector<1x128x128xf32>
    %142 = vector.shape_cast %141 : vector<1x128x128xf32> to vector<128x128xf32>
    %cst_65 = arith.constant dense<0.000000e+00> : vector<24x128xf32>
    %143 = tpu.matmul %140, %142, %cst_65 {dimension_numbers = #tpu.dot_dimension_numbers<[1], [0], [0], [1], [0, 0, 1, 1], [], []>} : vector<24x128xf32>, vector<128x128xf32>, vector<24x128xf32> -> vector<24x128xf32>
    %144 = vector.broadcast %109 : vector<1x128xf32> to vector<24x128xf32>
    %145 = arith.addf %143, %144 : vector<24x128xf32>
    %cst_66 = arith.constant 0.000000e+00 : f32
    %146 = vector.broadcast %cst_66 : f32 to vector<24x128xf32>
    %147 = arith.maximumf %145, %146 : vector<24x128xf32>
    %cst_67 = arith.constant dense<0.000000e+00> : vector<4x128xf32>
    %148 = tpu.matmul %20, %147, %cst_67 {dimension_numbers = #tpu.dot_dimension_numbers<[1], [0], [0], [1], [0, 0, 1, 1], [], []>} : vector<4x24xf32>, vector<24x128xf32>, vector<4x128xf32> -> vector<4x128xf32>
    %c12 = arith.constant 12 : index
    %c0_68 = arith.constant 0 : index
    %149 = vector.load %arg4[%c12, %c0_68] : memref<24x128xf32, #tpu.memory_space<vmem>>, vector<1x128xf32>
    %c13 = arith.constant 13 : index
    %c0_69 = arith.constant 0 : index
    %150 = vector.load %arg4[%c13, %c0_69] : memref<24x128xf32, #tpu.memory_space<vmem>>, vector<1x128xf32>
    %c14 = arith.constant 14 : index
    %c0_70 = arith.constant 0 : index
    %151 = vector.load %arg4[%c14, %c0_70] : memref<24x128xf32, #tpu.memory_space<vmem>>, vector<1x128xf32>
    %cst_71 = arith.constant dense<0.000000e+00> : vector<128xf32>
    %152 = vector.multi_reduction <add>, %148, %cst_71 [0] : vector<4x128xf32> to vector<128xf32>
    %153 = vector.shape_cast %152 : vector<128xf32> to vector<1x128xf32>
    %cst_72 = arith.constant 4.000000e+00 : f32
    %154 = vector.broadcast %cst_72 : f32 to vector<1x128xf32>
    %155 = arith.divf %153, %154 : vector<1x128xf32>
    %156 = vector.broadcast %155 : vector<1x128xf32> to vector<4x128xf32>
    %157 = arith.subf %148, %156 : vector<4x128xf32>
    %158 = arith.mulf %157, %157 : vector<4x128xf32>
    %cst_73 = arith.constant dense<0.000000e+00> : vector<128xf32>
    %159 = vector.multi_reduction <add>, %158, %cst_73 [0] : vector<4x128xf32> to vector<128xf32>
    %160 = vector.shape_cast %159 : vector<128xf32> to vector<1x128xf32>
    %cst_74 = arith.constant 4.000000e+00 : f32
    %161 = vector.broadcast %cst_74 : f32 to vector<1x128xf32>
    %162 = arith.divf %160, %161 : vector<1x128xf32>
    %163 = vector.broadcast %155 : vector<1x128xf32> to vector<4x128xf32>
    %164 = arith.subf %148, %163 : vector<4x128xf32>
    %cst_75 = arith.constant 9.99999974E-6 : f32
    %165 = vector.broadcast %cst_75 : f32 to vector<1x128xf32>
    %166 = arith.addf %162, %165 : vector<1x128xf32>
    %167 = math.rsqrt %166 : vector<1x128xf32>
    %168 = vector.broadcast %167 : vector<1x128xf32> to vector<4x128xf32>
    %169 = arith.mulf %164, %168 : vector<4x128xf32>
    %170 = vector.broadcast %149 : vector<1x128xf32> to vector<4x128xf32>
    %171 = arith.mulf %169, %170 : vector<4x128xf32>
    %172 = vector.broadcast %150 : vector<1x128xf32> to vector<4x128xf32>
    %173 = arith.addf %171, %172 : vector<4x128xf32>
    %c3_76 = arith.constant 3 : index
    %c0_77 = arith.constant 0 : index
    %c0_78 = arith.constant 0 : index
    %174 = vector.load %arg5[%c3_76, %c0_77, %c0_78] : memref<5x128x128xf32, #tpu.memory_space<vmem>>, vector<1x128x128xf32>
    %175 = vector.shape_cast %174 : vector<1x128x128xf32> to vector<128x128xf32>
    %cst_79 = arith.constant dense<0.000000e+00> : vector<4x128xf32>
    %176 = tpu.matmul %173, %175, %cst_79 {dimension_numbers = #tpu.dot_dimension_numbers<[1], [0], [0], [1], [0, 0, 1, 1], [], []>} : vector<4x128xf32>, vector<128x128xf32>, vector<4x128xf32> -> vector<4x128xf32>
    %177 = vector.broadcast %151 : vector<1x128xf32> to vector<4x128xf32>
    %178 = arith.addf %176, %177 : vector<4x128xf32>
    %cst_80 = arith.constant 0.000000e+00 : f32
    %179 = vector.broadcast %cst_80 : f32 to vector<4x128xf32>
    %180 = arith.maximumf %178, %179 : vector<4x128xf32>
    %c15 = arith.constant 15 : index
    %c0_81 = arith.constant 0 : index
    %181 = vector.load %arg4[%c15, %c0_81] : memref<24x128xf32, #tpu.memory_space<vmem>>, vector<1x128xf32>
    %c16 = arith.constant 16 : index
    %c0_82 = arith.constant 0 : index
    %182 = vector.load %arg4[%c16, %c0_82] : memref<24x128xf32, #tpu.memory_space<vmem>>, vector<1x128xf32>
    %cst_83 = arith.constant dense<0.000000e+00> : vector<128xf32>
    %183 = vector.multi_reduction <add>, %180, %cst_83 [0] : vector<4x128xf32> to vector<128xf32>
    %184 = vector.shape_cast %183 : vector<128xf32> to vector<1x128xf32>
    %cst_84 = arith.constant 4.000000e+00 : f32
    %185 = vector.broadcast %cst_84 : f32 to vector<1x128xf32>
    %186 = arith.divf %184, %185 : vector<1x128xf32>
    %187 = vector.broadcast %186 : vector<1x128xf32> to vector<4x128xf32>
    %188 = arith.subf %180, %187 : vector<4x128xf32>
    %189 = arith.mulf %188, %188 : vector<4x128xf32>
    %cst_85 = arith.constant dense<0.000000e+00> : vector<128xf32>
    %190 = vector.multi_reduction <add>, %189, %cst_85 [0] : vector<4x128xf32> to vector<128xf32>
    %191 = vector.shape_cast %190 : vector<128xf32> to vector<1x128xf32>
    %cst_86 = arith.constant 4.000000e+00 : f32
    %192 = vector.broadcast %cst_86 : f32 to vector<1x128xf32>
    %193 = arith.divf %191, %192 : vector<1x128xf32>
    %194 = vector.broadcast %186 : vector<1x128xf32> to vector<4x128xf32>
    %195 = arith.subf %180, %194 : vector<4x128xf32>
    %cst_87 = arith.constant 9.99999974E-6 : f32
    %196 = vector.broadcast %cst_87 : f32 to vector<1x128xf32>
    %197 = arith.addf %193, %196 : vector<1x128xf32>
    %198 = math.rsqrt %197 : vector<1x128xf32>
    %199 = vector.broadcast %198 : vector<1x128xf32> to vector<4x128xf32>
    %200 = arith.mulf %195, %199 : vector<4x128xf32>
    %201 = vector.broadcast %181 : vector<1x128xf32> to vector<4x128xf32>
    %202 = arith.mulf %200, %201 : vector<4x128xf32>
    %203 = vector.broadcast %182 : vector<1x128xf32> to vector<4x128xf32>
    %204 = arith.addf %202, %203 : vector<4x128xf32>
    %c17 = arith.constant 17 : index
    %c0_88 = arith.constant 0 : index
    %205 = vector.load %arg4[%c17, %c0_88] : memref<24x128xf32, #tpu.memory_space<vmem>>, vector<1x128xf32>
    %c4_89 = arith.constant 4 : index
    %c0_90 = arith.constant 0 : index
    %c0_91 = arith.constant 0 : index
    %206 = vector.load %arg5[%c4_89, %c0_90, %c0_91] : memref<5x128x128xf32, #tpu.memory_space<vmem>>, vector<1x128x128xf32>
    %207 = vector.shape_cast %206 : vector<1x128x128xf32> to vector<128x128xf32>
    %cst_92 = arith.constant dense<0.000000e+00> : vector<4x128xf32>
    %208 = tpu.matmul %204, %207, %cst_92 {dimension_numbers = #tpu.dot_dimension_numbers<[1], [0], [0], [1], [0, 0, 1, 1], [], []>} : vector<4x128xf32>, vector<128x128xf32>, vector<4x128xf32> -> vector<4x128xf32>
    %209 = vector.broadcast %205 : vector<1x128xf32> to vector<4x128xf32>
    %210 = arith.addf %208, %209 : vector<4x128xf32>
    %cst_93 = arith.constant dense<0xFF800000> : vector<4xf32>
    %211 = vector.multi_reduction <maximumf>, %210, %cst_93 [1] : vector<4x128xf32> to vector<4xf32>
    %212 = vector.shape_cast %211 : vector<4xf32> to vector<4x1xf32>
    %213 = vector.broadcast %212 : vector<4x1xf32> to vector<4x128xf32>
    %214 = arith.subf %210, %213 : vector<4x128xf32>
    %215 = math.exp %214 : vector<4x128xf32>
    %cst_94 = arith.constant dense<0.000000e+00> : vector<4xf32>
    %216 = vector.multi_reduction <add>, %215, %cst_94 [1] : vector<4x128xf32> to vector<4xf32>
    %217 = vector.shape_cast %216 : vector<4xf32> to vector<4x1xf32>
    %218 = math.log %217 : vector<4x1xf32>
    %219 = vector.broadcast %218 : vector<4x1xf32> to vector<4x128xf32>
    %220 = arith.subf %214, %219 : vector<4x128xf32>
    %c0_95 = arith.constant 0 : index
    %c0_96 = arith.constant 0 : index
    %221 = vector.load %arg6[%c0_95, %c0_96] : memref<4x128xf32, #tpu.memory_space<vmem>>, vector<4x128xf32>
    tpu.vector_store %arg6[%c0_95, %c0_96], %220 {strides = array<i32>} : memref<4x128xf32, #tpu.memory_space<vmem>>, vector<4x128xf32>,
    return
  }
}

</mosaic_0001>

<llo_original>
// kernel: gnn_forward.1
$region0: #{gnn_forward.1}
  #allocation0 [shape = 'u32[]', space=smem, size = 0x4, offset = 0x4, fixed_abs, tag = 'smem constant byte address 0x4 - core index']
  #allocation1 [shape = 'u32[144,128]{1,0:T(1,128)}', space=vmem, size = 0x12000, scoped, tag = 'internal scratch']
  %s0 = inlined_call_operand.vmem [shape: f32[24,128], index: 0, kind: input, shape index: {}]
  %s1 = inlined_call_operand.vmem [shape: s32[48,1], index: 1, kind: input, shape index: {}]
  %s2 = inlined_call_operand.vmem [shape: s32[1,48], index: 2, kind: input, shape index: {}]
  %s3 = inlined_call_operand.vmem [shape: s32[1,24], index: 3, kind: input, shape index: {}]
  %s4 = inlined_call_operand.vmem [shape: f32[24,128], index: 4, kind: input, shape index: {}]
  %s5 = inlined_call_operand.vmem [shape: f32[5,128,128], index: 5, kind: input, shape index: {}]
  %s6 = inlined_call_operand.hbm [shape: f32[4,128], index: 6, kind: output, shape index: {}]
  %s7 = sld [smem:[#allocation0]]
  $region34: #{gnn_forward.1} parent=0
    _
  %s9 = ssub.s32 1, %s7
  %s10 = scalar_select 0, %s9, %s7
  $region1: #{gnn_forward.1} parent=0
    #allocation2 [shape = 'u8[2048]{0}', space=vmem, size = 0x800, scoped, tag = 'output window, operand 0, single buffered']
    #allocation3 [shape = 's32[1]{0}', space=sflag, size = 0x4, scoped, tag = 'scoped memory for gnn_forward.1']
    %11 = vsyncpa [#allocation3], 0
    // Predicated region
    $region2: #{gnn_forward.1} parent=1 // pred_check
      _
    $region3: #{gnn_forward.1} parent=1 // pred_check_branch
      %13 = sbr.rel (0) target = $region5
    $region4: #{gnn_forward.1} parent=1 // pred_region
      _
    $region5: #{gnn_forward.1} parent=1 // pred_fallthru
      _
    // Predicated region
    $region6: #{gnn_forward.1} parent=1 // pred_check
      _
    $region7: #{gnn_forward.1} parent=1 // pred_check_branch
      %15 = sbr.rel (0) target = $region9
    $region8: #{gnn_forward.1} parent=1 // pred_region
      _
    $region9: #{gnn_forward.1} parent=1 // pred_fallthru
      _
    // Predicated region
    $region10: #{gnn_forward.1} parent=1 // pred_check
      _
    $region11: #{gnn_forward.1} parent=1 // pred_check_branch
      %17 = sbr.rel (0) target = $region13
    $region12: #{gnn_forward.1} parent=1 // pred_region
      _
    $region13: #{gnn_forward.1} parent=1 // pred_fallthru
      _
    // Predicated region
    $region14: #{gnn_forward.1} parent=1 // pred_check
      _
    $region15: #{gnn_forward.1} parent=1 // pred_check_branch
      %19 = sbr.rel (0) target = $region17
    $region16: #{gnn_forward.1} parent=1 // pred_region
      _
    $region17: #{gnn_forward.1} parent=1 // pred_fallthru
      _
    // Predicated region
    $region18: #{gnn_forward.1} parent=1 // pred_check
      _
    $region19: #{gnn_forward.1} parent=1 // pred_check_branch
      %21 = sbr.rel (0) target = $region21
    $region20: #{gnn_forward.1} parent=1 // pred_region
      _
    $region21: #{gnn_forward.1} parent=1 // pred_fallthru
      _
    // Predicated region
    $region22: #{gnn_forward.1} parent=1 // pred_check
      _
    $region23: #{gnn_forward.1} parent=1 // pred_check_branch
      %23 = sbr.rel (0) target = $region25
    $region24: #{gnn_forward.1} parent=1 // pred_region
      _
    $region25: #{gnn_forward.1} parent=1 // pred_fallthru
      _
    %v24 = vlaneseq
    %v25 = vand.u32 %v24, 127
    %v26 = vld [vmem:[%s1] sm:$0xff]
    %v27 = vld [vmem:[%s1 + $0x8] sm:$0xff]
    %v28 = vld [vmem:[%s1 + $0x10] sm:$0xff]
    %v29 = vld [vmem:[%s1 + $0x18] sm:$0xff]
    %v30 = vld [vmem:[%s1 + $0x20] sm:$0xff]
    %v31 = vld [vmem:[%s1 + $0x28] sm:$0xff]
    %32 = vset.pattern.permute.xlu0 0
    %33 = vperm.xlu0 %32, %v26
    %v34 = vpop.permute.xlu0 %33
    %35 = vset.pattern.permute.xlu0 0
    %36 = vperm.xlu0 %35, %v27
    %v37 = vpop.permute.xlu0 %36
    %38 = vset.pattern.permute.xlu0 0
    %39 = vperm.xlu0 %38, %v28
    %v40 = vpop.permute.xlu0 %39
    %41 = vset.pattern.permute.xlu0 0
    %42 = vperm.xlu0 %41, %v29
    %v43 = vpop.permute.xlu0 %42
    %44 = vset.pattern.permute.xlu0 0
    %45 = vperm.xlu0 %44, %v30
    %v46 = vpop.permute.xlu0 %45
    %47 = vset.pattern.permute.xlu0 0
    %48 = vperm.xlu0 %47, %v31
    %v49 = vpop.permute.xlu0 %48
    %vm50 = vcmp.eq.s32.totalorder %v34, %v25
    %vm51 = vcmp.eq.s32.totalorder %v37, %v25
    %vm52 = vcmp.eq.s32.totalorder %v40, %v25
    %vm53 = vcmp.eq.s32.totalorder %v43, %v25
    %vm54 = vcmp.eq.s32.totalorder %v46, %v25
    %vm55 = vcmp.eq.s32.totalorder %v49, %v25
    %v56 = vsel %vm50, 1.0, 0.0
    %v57 = vsel %vm51, 1.0, 0.0
    %v58 = vsel %vm52, 1.0, 0.0
    %v59 = vsel %vm53, 1.0, 0.0
    %v60 = vsel %vm54, 1.0, 0.0
    %v61 = vsel %vm55, 1.0, 0.0
    %v62 = vlaneseq
    %v63 = vshrl.u32 %v62, 7
    %v64 = vadd.s32 %v63, 8
    %v65 = vadd.s32 %v63, 16
    %v66 = vld [vmem:[%s2] sm:$0x1]
    %v67 = vlaneseq
    %v68 = vshrl.u32 %v67, 7
    %v69 = vsub.s32 0, %v68
    %v70 = vrot.slane %v66, %v69
    %vm71 = vcmp.eq.s32.totalorder %v70, %v63
    %vm72 = vcmp.eq.s32.totalorder %v70, %v64
    %vm73 = vcmp.eq.s32.totalorder %v70, %v65
    %v74 = vsel %vm71, 1.0, 0.0
    %v75 = vsel %vm72, 1.0, 0.0
    %v76 = vsel %vm73, 1.0, 0.0
    %v77 = vld [vmem:[%s3] sm:$0x1]
    %v78 = vlaneseq
    %v79 = vshrl.u32 %v78, 7
    %v80 = vsub.s32 0, %v79
    %v81 = vrot.slane %v77, %v80
    %vm82 = vcmp.eq.s32.totalorder %v81, %v63
    %v83 = vsel %vm82, 1.0, 0.0
    %v84 = vld [vmem:[%s0] sm:$0xff]
    %v85 = vld [vmem:[%s0 + $0x8] sm:$0xff]
    %v86 = vld [vmem:[%s0 + $0x10] sm:$0xff]
    %v87 = vld [vmem:[%s4] sm:$0x1]
    %v88 = vld [vmem:[%s4 + $0x1] sm:$0x1]
    %v89 = vld [vmem:[%s4 + $0x2] sm:$0x1]
    %v90 = vld [vmem:[%s4 + $0x3] sm:$0x1]
    %v91 = vadd.f32 %v84, %v85
    %v92 = vadd.f32 %v91, %v86
    %v93 = vrot.slane %v92, 4
    %v94 = vadd.f32 %v92, %v93
    %v95 = vrot.slane %v94, 2
    %v96 = vadd.f32 %v94, %v95
    %v97 = vrot.slane %v96, 1
    %v98 = vadd.f32 %v96, %v97
    %v99 = vrcp.pop 24.0
    %v100 = vmul.f32 %v98, %v99
    %v101 = vsub.f32 %v84, %v100
    %v102 = vsub.f32 %v85, %v100
    %v103 = vsub.f32 %v86, %v100
    %v104 = vmul.f32 %v101, %v101
    %v105 = vmul.f32 %v102, %v102
    %v106 = vmul.f32 %v103, %v103
    %v107 = vadd.f32 %v104, %v105
    %v108 = vadd.f32 %v107, %v106
    %v109 = vrot.slane %v108, 4
    %v110 = vadd.f32 %v108, %v109
    %v111 = vrot.slane %v110, 2
    %v112 = vadd.f32 %v110, %v111
    %v113 = vrot.slane %v112, 1
    %v114 = vadd.f32 %v112, %v113
    %v115 = vmul.f32 %v114, %v99
    %v116 = vadd.f32 %v115, 1e-05
    %v117 = vrsqrt.pop %v116
    %v118 = vmul.f32 %v101, %v117
    %v119 = vmul.f32 %v102, %v117
    %v120 = vmul.f32 %v103, %v117
    %v121 = vlaneseq
    %v122 = vshrl.u32 %v121, 7
    %v123 = vsub.s32 0, %v122
    %v124 = vrot.slane %v87, %v123
    %v125 = vmul.f32 %v118, %v124
    %v126 = vmul.f32 %v119, %v124
    %v127 = vmul.f32 %v120, %v124
    %v128 = vlaneseq
    %v129 = vshrl.u32 %v128, 7
    %v130 = vsub.s32 0, %v129
    %v131 = vrot.slane %v88, %v130
    %v132 = vadd.f32 %v125, %v131
    %v133 = vadd.f32 %v126, %v131
    %v134 = vadd.f32 %v127, %v131
    %v135 = vlaneseq
    %v136 = vshrl.u32 %v135, 7
    %v137 = vsub.s32 0, %v136
    %v138 = vrot.slane %v89, %v137
    %vm139 = vcmask 195584
    %v141 = vsel %vm139, %v56, 0
    %v144 = vsel %vm139, %v57, 0
    %v147 = vsel %vm139, %v58, 0
    %v150 = vsel %vm139, %v59, 0
    %v153 = vsel %vm139, %v60, 0
    %v156 = vsel %vm139, %v61, 0
    %158 = vmatprep.subr.mxu0 0.0
    %159 = vmatpush1.msra.mxu0 %v132
    %160 = vmatprep.subr.mxu0 0.0
    %161 = vmatpush1.msra.mxu0 %v133
    %162 = vmatprep.subr.mxu0 0.0
    %163 = vmatpush1.msra.mxu0 %v134
    %164 = vmatprep.subr.mxu0 0.0
    %165 = vmatpush1.msra.mxu0 0.0
    %166 = vmatprep.subr.mxu0 0.0
    %167 = vmatpush1.msra.mxu0 0.0
    %168 = vmatprep.subr.mxu0 0.0
    %169 = vmatpush1.msra.mxu0 0.0
    %170 = vmatprep.subr.mxu0 0.0
    %171 = vmatpush1.msra.mxu0 0.0
    %172 = vmatprep.subr.mxu0 0.0
    %173 = vmatpush1.msra.mxu0 0.0
    %174 = vmatprep.subr.mxu0 0.0
    %175 = vmatpush1.msra.mxu0 0.0
    %176 = vmatprep.subr.mxu0 0.0
    %177 = vmatpush1.msra.mxu0 0.0
    %178 = vmatprep.subr.mxu0 0.0
    %179 = vmatpush1.msra.mxu0 0.0
    %180 = vmatprep.subr.mxu0 0.0
    %181 = vmatpush1.msra.mxu0 0.0
    %182 = vmatprep.subr.mxu0 0.0
    %183 = vmatpush1.msra.mxu0 0.0
    %184 = vmatprep.subr.mxu0 0.0
    %185 = vmatpush1.msra.mxu0 0.0
    %186 = vmatprep.subr.mxu0 0.0
    %187 = vmatpush1.msra.mxu0 0.0
    %188 = vmatprep.subr.mxu0 0.0
    %189 = vmatpush1.msra.mxu0 0.0
    %190 = vmatprep.subr.mxu0 0.0
    %191 = vmatpush1.msra.mxu0 0.0
    %192 = vmatprep.subr.mxu0 0.0
    %193 = vmatpush1.msra.mxu0 0.0
    %194 = vmatprep.subr.mxu0 0.0
    %195 = vmatpush1.msra.mxu0 0.0
    %196 = vmatprep.subr.mxu0 0.0
    %197 = vmatpush1.msra.mxu0 0.0
    %198 = vmatprep.subr.mxu0 0.0
    %199 = vmatpush1.msra.mxu0 0.0
    %200 = vmatprep.subr.mxu0 0.0
    %201 = vmatpush1.msra.mxu0 0.0
    %202 = vmatprep.subr.mxu0 0.0
    %203 = vmatpush1.msra.mxu0 0.0
    %204 = vmatprep.subr.mxu0 0.0
    %205 = vmatpush1.msra.mxu0 0.0
    %206 = vmatprep.subr.mxu0 0.0
    %207 = vmatpush1.msra.mxu0 0.0
    %208 = vmatprep.subr.mxu0 0.0
    %209 = vmatpush1.msra.mxu0 0.0
    %210 = vmatprep.subr.mxu0 0.0
    %211 = vmatpush1.msra.mxu0 0.0
    %212 = vmatprep.subr.mxu0 0.0
    %213 = vmatpush1.msra.mxu0 0.0
    %214 = vmatprep.subr.mxu0 0.0
    %215 = vmatpush1.msra.mxu0 0.0
    %216 = vmatprep.subr.mxu0 0.0
    %217 = vmatpush1.msra.mxu0 0.0
    %218 = vmatprep.subr.mxu0 0.0
    %219 = vmatpush1.msra.mxu0 0.0
    %220 = vmatprep.subr.mxu0 0.0
    %221 = vmatpush1.msra.mxu0 0.0
    %222 = vmatprep.mubr.f32.mxu0 0.0
    %223 = vmatmul.mubr.f32.gmra.mrb[0].mxu0 %v141
    %v224 = vpop.f32.mrb[0].mxu0
    %v225 = vadd.f32 %v138, %v224
    %v226 = vpop.f32.mrb[0].mxu0
    %227 = vmatprep.mubr.f32.mxu0 0.0
    %228 = vmatmul.mubr.f32.gmra.mrb[0].mxu0 %v144
    %v229 = vpop.f32.mrb[0].mxu0
    %v230 = vadd.f32 %v138, %v229
    %v231 = vpop.f32.mrb[0].mxu0
    %232 = vmatprep.mubr.f32.mxu0 0.0
    %233 = vmatmul.mubr.f32.gmra.mrb[0].mxu0 %v147
    %v234 = vpop.f32.mrb[0].mxu0
    %v235 = vadd.f32 %v138, %v234
    %v236 = vpop.f32.mrb[0].mxu0
    %237 = vmatprep.mubr.f32.mxu0 0.0
    %238 = vmatmul.mubr.f32.gmra.mrb[0].mxu0 %v150
    %v239 = vpop.f32.mrb[0].mxu0
    %v240 = vadd.f32 %v138, %v239
    %v241 = vpop.f32.mrb[0].mxu0
    %242 = vmatprep.mubr.f32.mxu0 0.0
    %243 = vmatmul.mubr.f32.gmra.mrb[0].mxu0 %v153
    %v244 = vpop.f32.mrb[0].mxu0
    %v245 = vadd.f32 %v138, %v244
    %v246 = vpop.f32.mrb[0].mxu0
    %247 = vmatprep.mubr.f32.mxu0 0.0
    %248 = vmatmul.mubr.f32.gmra.mrb[0].mxu0 %v156
    %v249 = vpop.f32.mrb[0].mxu0
    %v250 = vadd.f32 %v138, %v249
    %v251 = vpop.f32.mrb[0].mxu0
    %252 = vdwg.mxu0
    %v253 = vmax.f32 %v225, 0.0
    %v254 = vmax.f32 %v230, 0.0
    %v255 = vmax.f32 %v235, 0.0
    %v256 = vmax.f32 %v240, 0.0
    %v257 = vmax.f32 %v245, 0.0
    %v258 = vmax.f32 %v250, 0.0
    %v259 = vadd.f32 %v253, 1e-07
    %v260 = vadd.f32 %v254, 1e-07
    %v261 = vadd.f32 %v255, 1e-07
    %v262 = vadd.f32 %v256, 1e-07
    %v263 = vadd.f32 %v257, 1e-07
    %v264 = vadd.f32 %v258, 1e-07
    %vm265 = vcmask 392192
    %v267 = vsel %vm265, %v74, 0
    %v270 = vsel %vm265, %v75, 0
    %v273 = vsel %vm265, %v76, 0
    %275 = vmatprep.subr.mxu0 0.0
    %276 = vmatpush1.msra.mxu0 %v259
    %277 = vmatprep.subr.mxu0 0.0
    %278 = vmatpush1.msra.mxu0 %v260
    %279 = vmatprep.subr.mxu0 0.0
    %280 = vmatpush1.msra.mxu0 %v261
    %281 = vmatprep.subr.mxu0 0.0
    %282 = vmatpush1.msra.mxu0 %v262
    %283 = vmatprep.subr.mxu0 0.0
    %284 = vmatpush1.msra.mxu0 %v263
    %285 = vmatprep.subr.mxu0 0.0
    %286 = vmatpush1.msra.mxu0 %v264
    %287 = vmatprep.subr.mxu0 0.0
    %288 = vmatpush1.msra.mxu0 0.0
    %289 = vmatprep.subr.mxu0 0.0
    %290 = vmatpush1.msra.mxu0 0.0
    %291 = vmatprep.subr.mxu0 0.0
    %292 = vmatpush1.msra.mxu0 0.0
    %293 = vmatprep.subr.mxu0 0.0
    %294 = vmatpush1.msra.mxu0 0.0
    %295 = vmatprep.subr.mxu0 0.0
    %296 = vmatpush1.msra.mxu0 0.0
    %297 = vmatprep.subr.mxu0 0.0
    %298 = vmatpush1.msra.mxu0 0.0
    %299 = vmatprep.subr.mxu0 0.0
    %300 = vmatpush1.msra.mxu0 0.0
    %301 = vmatprep.subr.mxu0 0.0
    %302 = vmatpush1.msra.mxu0 0.0
    %303 = vmatprep.subr.mxu0 0.0
    %304 = vmatpush1.msra.mxu0 0.0
    %305 = vmatprep.subr.mxu0 0.0
    %306 = vmatpush1.msra.mxu0 0.0
    %307 = vmatprep.subr.mxu0 0.0
    %308 = vmatpush1.msra.mxu0 0.0
    %309 = vmatprep.subr.mxu0 0.0
    %310 = vmatpush1.msra.mxu0 0.0
    %311 = vmatprep.subr.mxu0 0.0
    %312 = vmatpush1.msra.mxu0 0.0
    %313 = vmatprep.subr.mxu0 0.0
    %314 = vmatpush1.msra.mxu0 0.0
    %315 = vmatprep.subr.mxu0 0.0
    %316 = vmatpush1.msra.mxu0 0.0
    %317 = vmatprep.subr.mxu0 0.0
    %318 = vmatpush1.msra.mxu0 0.0
    %319 = vmatprep.subr.mxu0 0.0
    %320 = vmatpush1.msra.mxu0 0.0
    %321 = vmatprep.subr.mxu0 0.0
    %322 = vmatpush1.msra.mxu0 0.0
    %323 = vmatprep.subr.mxu0 0.0
    %324 = vmatpush1.msra.mxu0 0.0
    %325 = vmatprep.subr.mxu0 0.0
    %326 = vmatpush1.msra.mxu0 0.0
    %327 = vmatprep.subr.mxu0 0.0
    %328 = vmatpush1.msra.mxu0 0.0
    %329 = vmatprep.subr.mxu0 0.0
    %330 = vmatpush1.msra.mxu0 0.0
    %331 = vmatprep.subr.mxu0 0.0
    %332 = vmatpush1.msra.mxu0 0.0
    %333 = vmatprep.subr.mxu0 0.0
    %334 = vmatpush1.msra.mxu0 0.0
    %335 = vmatprep.subr.mxu0 0.0
    %336 = vmatpush1.msra.mxu0 0.0
    %337 = vmatprep.subr.mxu0 0.0
    %338 = vmatpush1.msra.mxu0 0.0
    %339 = vmatprep.mubr.f32.mxu0 0.0
    %340 = vmatmul.mubr.f32.gmra.mrb[0].mxu0 %v267
    %v341 = vpop.f32.mrb[0].mxu0
    %v342 = vadd.f32 0.0, %v341
    %v343 = vpop.f32.mrb[0].mxu0
    %344 = vmatprep.mubr.f32.mxu0 0.0
    %345 = vmatmul.mubr.f32.gmra.mrb[0].mxu0 %v270
    %v346 = vpop.f32.mrb[0].mxu0
    %v347 = vadd.f32 0.0, %v346
    %v348 = vpop.f32.mrb[0].mxu0
    %349 = vmatprep.mubr.f32.mxu0 0.0
    %350 = vmatmul.mubr.f32.gmra.mrb[0].mxu0 %v273
    %v351 = vpop.f32.mrb[0].mxu0
    %v352 = vadd.f32 0.0, %v351
    %v353 = vpop.f32.mrb[0].mxu0
    %354 = vdwg.mxu0
    %v355 = vadd.f32 %v132, %v342
    %v356 = vadd.f32 %v133, %v347
    %v357 = vadd.f32 %v134, %v352
    %v358 = vld [vmem:[%s5] sm:$0xff]
    %v359 = vld [vmem:[%s5 + $0x8] sm:$0xff]
    %v360 = vld [vmem:[%s5 + $0x10] sm:$0xff]
    %v361 = vld [vmem:[%s5 + $0x18] sm:$0xff]
    %v362 = vld [vmem:[%s5 + $0x20] sm:$0xff]
    %v363 = vld [vmem:[%s5 + $0x28] sm:$0xff]
    %v364 = vld [vmem:[%s5 + $0x30] sm:$0xff]
    %v365 = vld [vmem:[%s5 + $0x38] sm:$0xff]
    %v366 = vld [vmem:[%s5 + $0x40] sm:$0xff]
    %v367 = vld [vmem:[%s5 + $0x48] sm:$0xff]
    %v368 = vld [vmem:[%s5 + $0x50] sm:$0xff]
    %v369 = vld [vmem:[%s5 + $0x58] sm:$0xff]
    %v370 = vld [vmem:[%s5 + $0x60] sm:$0xff]
    %v371 = vld [vmem:[%s5 + $0x68] sm:$0xff]
    %v372 = vld [vmem:[%s5 + $0x70] sm:$0xff]
    %v373 = vld [vmem:[%s5 + $0x78] sm:$0xff]
    %v374 = vlaneseq
    %v375 = vshrl.u32 %v374, 7
    %v376 = vsub.s32 0, %v375
    %v377 = vrot.slane %v90, %v376
    %378 = vmatprep.subr.mxu0 0.0
    %379 = vmatpush1.msra.mxu0 %v358
    %380 = vmatprep.subr.mxu0 0.0
    %381 = vmatpush1.msra.mxu0 %v359
    %382 = vmatprep.subr.mxu0 0.0
    %383 = vmatpush1.msra.mxu0 %v360
    %384 = vmatprep.subr.mxu0 0.0
    %385 = vmatpush1.msra.mxu0 %v361
    %386 = vmatprep.subr.mxu0 0.0
    %387 = vmatpush1.msra.mxu0 %v362
    %388 = vmatprep.subr.mxu0 0.0
    %389 = vmatpush1.msra.mxu0 %v363
    %390 = vmatprep.subr.mxu0 0.0
    %391 = vmatpush1.msra.mxu0 %v364
    %392 = vmatprep.subr.mxu0 0.0
    %393 = vmatpush1.msra.mxu0 %v365
    %394 = vmatprep.subr.mxu0 0.0
    %395 = vmatpush1.msra.mxu0 %v366
    %396 = vmatprep.subr.mxu0 0.0
    %397 = vmatpush1.msra.mxu0 %v367
    %398 = vmatprep.subr.mxu0 0.0
    %399 = vmatpush1.msra.mxu0 %v368
    %400 = vmatprep.subr.mxu0 0.0
    %401 = vmatpush1.msra.mxu0 %v369
    %402 = vmatprep.subr.mxu0 0.0
    %403 = vmatpush1.msra.mxu0 %v370
    %404 = vmatprep.subr.mxu0 0.0
    %405 = vmatpush1.msra.mxu0 %v371
    %406 = vmatprep.subr.mxu0 0.0
    %407 = vmatpush1.msra.mxu0 %v372
    %408 = vmatprep.subr.mxu0 0.0
    %409 = vmatpush1.msra.mxu0 %v373
    %410 = vmatprep.subr.mxu0 0.0
    %411 = vmatpush1.msra.mxu0 0.0
    %412 = vmatprep.subr.mxu0 0.0
    %413 = vmatpush1.msra.mxu0 0.0
    %414 = vmatprep.subr.mxu0 0.0
    %415 = vmatpush1.msra.mxu0 0.0
    %416 = vmatprep.subr.mxu0 0.0
    %417 = vmatpush1.msra.mxu0 0.0
    %418 = vmatprep.subr.mxu0 0.0
    %419 = vmatpush1.msra.mxu0 0.0
    %420 = vmatprep.subr.mxu0 0.0
    %421 = vmatpush1.msra.mxu0 0.0
    %422 = vmatprep.subr.mxu0 0.0
    %423 = vmatpush1.msra.mxu0 0.0
    %424 = vmatprep.subr.mxu0 0.0
    %425 = vmatpush1.msra.mxu0 0.0
    %426 = vmatprep.subr.mxu0 0.0
    %427 = vmatpush1.msra.mxu0 0.0
    %428 = vmatprep.subr.mxu0 0.0
    %429 = vmatpush1.msra.mxu0 0.0
    %430 = vmatprep.subr.mxu0 0.0
    %431 = vmatpush1.msra.mxu0 0.0
    %432 = vmatprep.subr.mxu0 0.0
    %433 = vmatpush1.msra.mxu0 0.0
    %434 = vmatprep.subr.mxu0 0.0
    %435 = vmatpush1.msra.mxu0 0.0
    %436 = vmatprep.subr.mxu0 0.0
    %437 = vmatpush1.msra.mxu0 0.0
    %438 = vmatprep.subr.mxu0 0.0
    %439 = vmatpush1.msra.mxu0 0.0
    %440 = vmatprep.subr.mxu0 0.0
    %441 = vmatpush1.msra.mxu0 0.0
    %442 = vmatprep.mubr.f32.mxu0 0.0
    %443 = vmatmul.mubr.f32.gmra.mrb[0].mxu0 %v355
    %v444 = vpop.f32.mrb[0].mxu0
    %v445 = vadd.f32 %v377, %v444
    %v446 = vpop.f32.mrb[0].mxu0
    %447 = vmatprep.mubr.f32.mxu0 0.0
    %448 = vmatmul.mubr.f32.gmra.mrb[0].mxu0 %v356
    %v449 = vpop.f32.mrb[0].mxu0
    %v450 = vadd.f32 %v377, %v449
    %v451 = vpop.f32.mrb[0].mxu0
    %452 = vmatprep.mubr.f32.mxu0 0.0
    %453 = vmatmul.mubr.f32.gmra.mrb[0].mxu0 %v357
    %v454 = vpop.f32.mrb[0].mxu0
    %v455 = vadd.f32 %v377, %v454
    %v456 = vpop.f32.mrb[0].mxu0
    %457 = vdwg.mxu0
    %v458 = vmax.f32 %v445, 0.0
    %v459 = vmax.f32 %v450, 0.0
    %v460 = vmax.f32 %v455, 0.0
    %v461 = vld [vmem:[%s4 + $0x4] sm:$0x1]
    %v462 = vld [vmem:[%s4 + $0x5] sm:$0x1]
    %v463 = vld [vmem:[%s4 + $0x6] sm:$0x1]
    %v464 = vld [vmem:[%s4 + $0x7] sm:$0x1]
    %v465 = vadd.f32 %v458, %v459
    %v466 = vadd.f32 %v465, %v460
    %v467 = vrot.slane %v466, 4
    %v468 = vadd.f32 %v466, %v467
    %v469 = vrot.slane %v468, 2
    %v470 = vadd.f32 %v468, %v469
    %v471 = vrot.slane %v470, 1
    %v472 = vadd.f32 %v470, %v471
    %v473 = vmul.f32 %v472, %v99
    %v474 = vsub.f32 %v458, %v473
    %v475 = vsub.f32 %v459, %v473
    %v476 = vsub.f32 %v460, %v473
    %v477 = vmul.f32 %v474, %v474
    %v478 = vmul.f32 %v475, %v475
    %v479 = vmul.f32 %v476, %v476
    %v480 = vadd.f32 %v477, %v478
    %v481 = vadd.f32 %v480, %v479
    %v482 = vrot.slane %v481, 4
    %v483 = vadd.f32 %v481, %v482
    %v484 = vrot.slane %v483, 2
    %v485 = vadd.f32 %v483, %v484
    %v486 = vrot.slane %v485, 1
    %v487 = vadd.f32 %v485, %v486
    %v488 = vmul.f32 %v487, %v99
    %v489 = vadd.f32 %v488, 1e-05
    %v490 = vrsqrt.pop %v489
    %v491 = vmul.f32 %v474, %v490
    %v492 = vmul.f32 %v475, %v490
    %v493 = vmul.f32 %v476, %v490
    %v494 = vlaneseq
    %v495 = vshrl.u32 %v494, 7
    %v496 = vsub.s32 0, %v495
    %v497 = vrot.slane %v461, %v496
    %v498 = vmul.f32 %v491, %v497
    %v499 = vmul.f32 %v492, %v497
    %v500 = vmul.f32 %v493, %v497
    %v501 = vlaneseq
    %v502 = vshrl.u32 %v501, 7
    %v503 = vsub.s32 0, %v502
    %v504 = vrot.slane %v462, %v503
    %v505 = vadd.f32 %v498, %v504
    %v506 = vadd.f32 %v499, %v504
    %v507 = vadd.f32 %v500, %v504
    %v508 = vlaneseq
    %v509 = vshrl.u32 %v508, 7
    %v510 = vsub.s32 0, %v509
    %v511 = vrot.slane %v463, %v510
    %512 = vmatprep.subr.mxu0 0.0
    %513 = vmatpush1.msra.mxu0 %v505
    %514 = vmatprep.subr.mxu0 0.0
    %515 = vmatpush1.msra.mxu0 %v506
    %516 = vmatprep.subr.mxu0 0.0
    %517 = vmatpush1.msra.mxu0 %v507
    %518 = vmatprep.subr.mxu0 0.0
    %519 = vmatpush1.msra.mxu0 0.0
    %520 = vmatprep.subr.mxu0 0.0
    %521 = vmatpush1.msra.mxu0 0.0
    %522 = vmatprep.subr.mxu0 0.0
    %523 = vmatpush1.msra.mxu0 0.0
    %524 = vmatprep.subr.mxu0 0.0
    %525 = vmatpush1.msra.mxu0 0.0
    %526 = vmatprep.subr.mxu0 0.0
    %527 = vmatpush1.msra.mxu0 0.0
    %528 = vmatprep.subr.mxu0 0.0
    %529 = vmatpush1.msra.mxu0 0.0
    %530 = vmatprep.subr.mxu0 0.0
    %531 = vmatpush1.msra.mxu0 0.0
    %532 = vmatprep.subr.mxu0 0.0
    %533 = vmatpush1.msra.mxu0 0.0
    %534 = vmatprep.subr.mxu0 0.0
    %535 = vmatpush1.msra.mxu0 0.0
    %536 = vmatprep.subr.mxu0 0.0
    %537 = vmatpush1.msra.mxu0 0.0
    %538 = vmatprep.subr.mxu0 0.0
    %539 = vmatpush1.msra.mxu0 0.0
    %540 = vmatprep.subr.mxu0 0.0
    %541 = vmatpush1.msra.mxu0 0.0
    %542 = vmatprep.subr.mxu0 0.0
    %543 = vmatpush1.msra.mxu0 0.0
    %544 = vmatprep.subr.mxu0 0.0
    %545 = vmatpush1.msra.mxu0 0.0
    %546 = vmatprep.subr.mxu0 0.0
    %547 = vmatpush1.msra.mxu0 0.0
    %548 = vmatprep.subr.mxu0 0.0
    %549 = vmatpush1.msra.mxu0 0.0
    %550 = vmatprep.subr.mxu0 0.0
    %551 = vmatpush1.msra.mxu0 0.0
    %552 = vmatprep.subr.mxu0 0.0
    %553 = vmatpush1.msra.mxu0 0.0
    %554 = vmatprep.subr.mxu0 0.0
    %555 = vmatpush1.msra.mxu0 0.0
    %556 = vmatprep.subr.mxu0 0.0
    %557 = vmatpush1.msra.mxu0 0.0
    %558 = vmatprep.subr.mxu0 0.0
    %559 = vmatpush1.msra.mxu0 0.0
    %560 = vmatprep.subr.mxu0 0.0
    %561 = vmatpush1.msra.mxu0 0.0
    %562 = vmatprep.subr.mxu0 0.0
    %563 = vmatpush1.msra.mxu0 0.0
    %564 = vmatprep.subr.mxu0 0.0
    %565 = vmatpush1.msra.mxu0 0.0
    %566 = vmatprep.subr.mxu0 0.0
    %567 = vmatpush1.msra.mxu0 0.0
    %568 = vmatprep.subr.mxu0 0.0
    %569 = vmatpush1.msra.mxu0 0.0
    %570 = vmatprep.subr.mxu0 0.0
    %571 = vmatpush1.msra.mxu0 0.0
    %572 = vmatprep.subr.mxu0 0.0
    %573 = vmatpush1.msra.mxu0 0.0
    %574 = vmatprep.subr.mxu0 0.0
    %575 = vmatpush1.msra.mxu0 0.0
    %576 = vmatprep.mubr.f32.mxu0 0.0
    %577 = vmatmul.mubr.f32.gmra.mrb[0].mxu0 %v141
    %v578 = vpop.f32.mrb[0].mxu0
    %v579 = vadd.f32 %v511, %v578
    %v580 = vpop.f32.mrb[0].mxu0
    %581 = vmatprep.mubr.f32.mxu0 0.0
    %582 = vmatmul.mubr.f32.gmra.mrb[0].mxu0 %v144
    %v583 = vpop.f32.mrb[0].mxu0
    %v584 = vadd.f32 %v511, %v583
    %v585 = vpop.f32.mrb[0].mxu0
    %586 = vmatprep.mubr.f32.mxu0 0.0
    %587 = vmatmul.mubr.f32.gmra.mrb[0].mxu0 %v147
    %v588 = vpop.f32.mrb[0].mxu0
    %v589 = vadd.f32 %v511, %v588
    %v590 = vpop.f32.mrb[0].mxu0
    %591 = vmatprep.mubr.f32.mxu0 0.0
    %592 = vmatmul.mubr.f32.gmra.mrb[0].mxu0 %v150
    %v593 = vpop.f32.mrb[0].mxu0
    %v594 = vadd.f32 %v511, %v593
    %v595 = vpop.f32.mrb[0].mxu0
    %596 = vmatprep.mubr.f32.mxu0 0.0
    %597 = vmatmul.mubr.f32.gmra.mrb[0].mxu0 %v153
    %v598 = vpop.f32.mrb[0].mxu0
    %v599 = vadd.f32 %v511, %v598
    %v600 = vpop.f32.mrb[0].mxu0
    %601 = vmatprep.mubr.f32.mxu0 0.0
    %602 = vmatmul.mubr.f32.gmra.mrb[0].mxu0 %v156
    %v603 = vpop.f32.mrb[0].mxu0
    %v604 = vadd.f32 %v511, %v603
    %v605 = vpop.f32.mrb[0].mxu0
    %606 = vdwg.mxu0
    %v607 = vmax.f32 %v579, 0.0
    %v608 = vmax.f32 %v584, 0.0
    %v609 = vmax.f32 %v589, 0.0
    %v610 = vmax.f32 %v594, 0.0
    %v611 = vmax.f32 %v599, 0.0
    %v612 = vmax.f32 %v604, 0.0
    %v613 = vadd.f32 %v607, 1e-07
    %v614 = vadd.f32 %v608, 1e-07
    %v615 = vadd.f32 %v609, 1e-07
    %v616 = vadd.f32 %v610, 1e-07
    %v617 = vadd.f32 %v611, 1e-07
    %v618 = vadd.f32 %v612, 1e-07
    %619 = vmatprep.subr.mxu0 0.0
    %620 = vmatpush1.msra.mxu0 %v613
    %621 = vmatprep.subr.mxu0 0.0
    %622 = vmatpush1.msra.mxu0 %v614
    %623 = vmatprep.subr.mxu0 0.0
    %624 = vmatpush1.msra.mxu0 %v615
    %625 = vmatprep.subr.mxu0 0.0
    %626 = vmatpush1.msra.mxu0 %v616
    %627 = vmatprep.subr.mxu0 0.0
    %628 = vmatpush1.msra.mxu0 %v617
    %629 = vmatprep.subr.mxu0 0.0
    %630 = vmatpush1.msra.mxu0 %v618
    %631 = vmatprep.subr.mxu0 0.0
    %632 = vmatpush1.msra.mxu0 0.0
    %633 = vmatprep.subr.mxu0 0.0
    %634 = vmatpush1.msra.mxu0 0.0
    %635 = vmatprep.subr.mxu0 0.0
    %636 = vmatpush1.msra.mxu0 0.0
    %637 = vmatprep.subr.mxu0 0.0
    %638 = vmatpush1.msra.mxu0 0.0
    %639 = vmatprep.subr.mxu0 0.0
    %640 = vmatpush1.msra.mxu0 0.0
    %641 = vmatprep.subr.mxu0 0.0
    %642 = vmatpush1.msra.mxu0 0.0
    %643 = vmatprep.subr.mxu0 0.0
    %644 = vmatpush1.msra.mxu0 0.0
    %645 = vmatprep.subr.mxu0 0.0
    %646 = vmatpush1.msra.mxu0 0.0
    %647 = vmatprep.subr.mxu0 0.0
    %648 = vmatpush1.msra.mxu0 0.0
    %649 = vmatprep.subr.mxu0 0.0
    %650 = vmatpush1.msra.mxu0 0.0
    %651 = vmatprep.subr.mxu0 0.0
    %652 = vmatpush1.msra.mxu0 0.0
    %653 = vmatprep.subr.mxu0 0.0
    %654 = vmatpush1.msra.mxu0 0.0
    %655 = vmatprep.subr.mxu0 0.0
    %656 = vmatpush1.msra.mxu0 0.0
    %657 = vmatprep.subr.mxu0 0.0
    %658 = vmatpush1.msra.mxu0 0.0
    %659 = vmatprep.subr.mxu0 0.0
    %660 = vmatpush1.msra.mxu0 0.0
    %661 = vmatprep.subr.mxu0 0.0
    %662 = vmatpush1.msra.mxu0 0.0
    %663 = vmatprep.subr.mxu0 0.0
    %664 = vmatpush1.msra.mxu0 0.0
    %665 = vmatprep.subr.mxu0 0.0
    %666 = vmatpush1.msra.mxu0 0.0
    %667 = vmatprep.subr.mxu0 0.0
    %668 = vmatpush1.msra.mxu0 0.0
    %669 = vmatprep.subr.mxu0 0.0
    %670 = vmatpush1.msra.mxu0 0.0
    %671 = vmatprep.subr.mxu0 0.0
    %672 = vmatpush1.msra.mxu0 0.0
    %673 = vmatprep.subr.mxu0 0.0
    %674 = vmatpush1.msra.mxu0 0.0
    %675 = vmatprep.subr.mxu0 0.0
    %676 = vmatpush1.msra.mxu0 0.0
    %677 = vmatprep.subr.mxu0 0.0
    %678 = vmatpush1.msra.mxu0 0.0
    %679 = vmatprep.subr.mxu0 0.0
    %680 = vmatpush1.msra.mxu0 0.0
    %681 = vmatprep.subr.mxu0 0.0
    %682 = vmatpush1.msra.mxu0 0.0
    %683 = vmatprep.mubr.f32.mxu0 0.0
    %684 = vmatmul.mubr.f32.gmra.mrb[0].mxu0 %v267
    %v685 = vpop.f32.mrb[0].mxu0
    %v686 = vadd.f32 0.0, %v685
    %v687 = vpop.f32.mrb[0].mxu0
    %688 = vmatprep.mubr.f32.mxu0 0.0
    %689 = vmatmul.mubr.f32.gmra.mrb[0].mxu0 %v270
    %v690 = vpop.f32.mrb[0].mxu0
    %v691 = vadd.f32 0.0, %v690
    %v692 = vpop.f32.mrb[0].mxu0
    %693 = vmatprep.mubr.f32.mxu0 0.0
    %694 = vmatmul.mubr.f32.gmra.mrb[0].mxu0 %v273
    %v695 = vpop.f32.mrb[0].mxu0
    %v696 = vadd.f32 0.0, %v695
    %v697 = vpop.f32.mrb[0].mxu0
    %698 = vdwg.mxu0
    %v699 = vadd.f32 %v505, %v686
    %v700 = vadd.f32 %v506, %v691
    %v701 = vadd.f32 %v507, %v696
    %s702 = scalar_lea.vmem %s5, 128
    %v703 = vld [vmem:[%s702] sm:$0xff]
    %v704 = vld [vmem:[%s702 + $0x8] sm:$0xff]
    %v705 = vld [vmem:[%s702 + $0x10] sm:$0xff]
    %v706 = vld [vmem:[%s702 + $0x18] sm:$0xff]
    %v707 = vld [vmem:[%s702 + $0x20] sm:$0xff]
    %v708 = vld [vmem:[%s702 + $0x28] sm:$0xff]
    %v709 = vld [vmem:[%s702 + $0x30] sm:$0xff]
    %v710 = vld [vmem:[%s702 + $0x38] sm:$0xff]
    %v711 = vld [vmem:[%s702 + $0x40] sm:$0xff]
    %v712 = vld [vmem:[%s702 + $0x48] sm:$0xff]
    %v713 = vld [vmem:[%s702 + $0x50] sm:$0xff]
    %v714 = vld [vmem:[%s702 + $0x58] sm:$0xff]
    %v715 = vld [vmem:[%s702 + $0x60] sm:$0xff]
    %v716 = vld [vmem:[%s702 + $0x68] sm:$0xff]
    %v717 = vld [vmem:[%s702 + $0x70] sm:$0xff]
    %v718 = vld [vmem:[%s702 + $0x78] sm:$0xff]
    %v719 = vlaneseq
    %v720 = vshrl.u32 %v719, 7
    %v721 = vsub.s32 0, %v720
    %v722 = vrot.slane %v464, %v721
    %723 = vmatprep.subr.mxu0 0.0
    %724 = vmatpush1.msra.mxu0 %v703
    %725 = vmatprep.subr.mxu0 0.0
    %726 = vmatpush1.msra.mxu0 %v704
    %727 = vmatprep.subr.mxu0 0.0
    %728 = vmatpush1.msra.mxu0 %v705
    %729 = vmatprep.subr.mxu0 0.0
    %730 = vmatpush1.msra.mxu0 %v706
    %731 = vmatprep.subr.mxu0 0.0
    %732 = vmatpush1.msra.mxu0 %v707
    %733 = vmatprep.subr.mxu0 0.0
    %734 = vmatpush1.msra.mxu0 %v708
    %735 = vmatprep.subr.mxu0 0.0
    %736 = vmatpush1.msra.mxu0 %v709
    %737 = vmatprep.subr.mxu0 0.0
    %738 = vmatpush1.msra.mxu0 %v710
    %739 = vmatprep.subr.mxu0 0.0
    %740 = vmatpush1.msra.mxu0 %v711
    %741 = vmatprep.subr.mxu0 0.0
    %742 = vmatpush1.msra.mxu0 %v712
    %743 = vmatprep.subr.mxu0 0.0
    %744 = vmatpush1.msra.mxu0 %v713
    %745 = vmatprep.subr.mxu0 0.0
    %746 = vmatpush1.msra.mxu0 %v714
    %747 = vmatprep.subr.mxu0 0.0
    %748 = vmatpush1.msra.mxu0 %v715
    %749 = vmatprep.subr.mxu0 0.0
    %750 = vmatpush1.msra.mxu0 %v716
    %751 = vmatprep.subr.mxu0 0.0
    %752 = vmatpush1.msra.mxu0 %v717
    %753 = vmatprep.subr.mxu0 0.0
    %754 = vmatpush1.msra.mxu0 %v718
    %755 = vmatprep.subr.mxu0 0.0
    %756 = vmatpush1.msra.mxu0 0.0
    %757 = vmatprep.subr.mxu0 0.0
    %758 = vmatpush1.msra.mxu0 0.0
    %759 = vmatprep.subr.mxu0 0.0
    %760 = vmatpush1.msra.mxu0 0.0
    %761 = vmatprep.subr.mxu0 0.0
    %762 = vmatpush1.msra.mxu0 0.0
    %763 = vmatprep.subr.mxu0 0.0
    %764 = vmatpush1.msra.mxu0 0.0
    %765 = vmatprep.subr.mxu0 0.0
    %766 = vmatpush1.msra.mxu0 0.0
    %767 = vmatprep.subr.mxu0 0.0
    %768 = vmatpush1.msra.mxu0 0.0
    %769 = vmatprep.subr.mxu0 0.0
    %770 = vmatpush1.msra.mxu0 0.0
    %771 = vmatprep.subr.mxu0 0.0
    %772 = vmatpush1.msra.mxu0 0.0
    %773 = vmatprep.subr.mxu0 0.0
    %774 = vmatpush1.msra.mxu0 0.0
    %775 = vmatprep.subr.mxu0 0.0
    %776 = vmatpush1.msra.mxu0 0.0
    %777 = vmatprep.subr.mxu0 0.0
    %778 = vmatpush1.msra.mxu0 0.0
    %779 = vmatprep.subr.mxu0 0.0
    %780 = vmatpush1.msra.mxu0 0.0
    %781 = vmatprep.subr.mxu0 0.0
    %782 = vmatpush1.msra.mxu0 0.0
    %783 = vmatprep.subr.mxu0 0.0
    %784 = vmatpush1.msra.mxu0 0.0
    %785 = vmatprep.subr.mxu0 0.0
    %786 = vmatpush1.msra.mxu0 0.0
    %787 = vmatprep.mubr.f32.mxu0 0.0
    %788 = vmatmul.mubr.f32.gmra.mrb[0].mxu0 %v699
    %v789 = vpop.f32.mrb[0].mxu0
    %v790 = vadd.f32 %v722, %v789
    %v791 = vpop.f32.mrb[0].mxu0
    %792 = vmatprep.mubr.f32.mxu0 0.0
    %793 = vmatmul.mubr.f32.gmra.mrb[0].mxu0 %v700
    %v794 = vpop.f32.mrb[0].mxu0
    %v795 = vadd.f32 %v722, %v794
    %v796 = vpop.f32.mrb[0].mxu0
    %797 = vmatprep.mubr.f32.mxu0 0.0
    %798 = vmatmul.mubr.f32.gmra.mrb[0].mxu0 %v701
    %v799 = vpop.f32.mrb[0].mxu0
    %v800 = vadd.f32 %v722, %v799
    %v801 = vpop.f32.mrb[0].mxu0
    %802 = vdwg.mxu0
    %v803 = vmax.f32 %v790, 0.0
    %v804 = vmax.f32 %v795, 0.0
    %v805 = vmax.f32 %v800, 0.0
    %v806 = vld [vmem:[%s4 + $0x8] sm:$0x1]
    %v807 = vld [vmem:[%s4 + $0x9] sm:$0x1]
    %v808 = vld [vmem:[%s4 + $0xa] sm:$0x1]
    %v809 = vld [vmem:[%s4 + $0xb] sm:$0x1]
    %v810 = vadd.f32 %v803, %v804
    %v811 = vadd.f32 %v810, %v805
    %v812 = vrot.slane %v811, 4
    %v813 = vadd.f32 %v811, %v812
    %v814 = vrot.slane %v813, 2
    %v815 = vadd.f32 %v813, %v814
    %v816 = vrot.slane %v815, 1
    %v817 = vadd.f32 %v815, %v816
    %v818 = vmul.f32 %v817, %v99
    %v819 = vsub.f32 %v803, %v818
    %v820 = vsub.f32 %v804, %v818
    %v821 = vsub.f32 %v805, %v818
    %v822 = vmul.f32 %v819, %v819
    %v823 = vmul.f32 %v820, %v820
    %v824 = vmul.f32 %v821, %v821
    %v825 = vadd.f32 %v822, %v823
    %v826 = vadd.f32 %v825, %v824
    %v827 = vrot.slane %v826, 4
    %v828 = vadd.f32 %v826, %v827
    %v829 = vrot.slane %v828, 2
    %v830 = vadd.f32 %v828, %v829
    %v831 = vrot.slane %v830, 1
    %v832 = vadd.f32 %v830, %v831
    %v833 = vmul.f32 %v832, %v99
    %v834 = vadd.f32 %v833, 1e-05
    %v835 = vrsqrt.pop %v834
    %v836 = vmul.f32 %v819, %v835
    %v837 = vmul.f32 %v820, %v835
    %v838 = vmul.f32 %v821, %v835
    %v839 = vlaneseq
    %v840 = vshrl.u32 %v839, 7
    %v841 = vsub.s32 0, %v840
    %v842 = vrot.slane %v806, %v841
    %v843 = vmul.f32 %v836, %v842
    %v844 = vmul.f32 %v837, %v842
    %v845 = vmul.f32 %v838, %v842
    %v846 = vlaneseq
    %v847 = vshrl.u32 %v846, 7
    %v848 = vsub.s32 0, %v847
    %v849 = vrot.slane %v807, %v848
    %v850 = vadd.f32 %v843, %v849
    %v851 = vadd.f32 %v844, %v849
    %v852 = vadd.f32 %v845, %v849
    %v853 = vlaneseq
    %v854 = vshrl.u32 %v853, 7
    %v855 = vsub.s32 0, %v854
    %v856 = vrot.slane %v808, %v855
    %857 = vmatprep.subr.mxu0 0.0
    %858 = vmatpush1.msra.mxu0 %v850
    %859 = vmatprep.subr.mxu0 0.0
    %860 = vmatpush1.msra.mxu0 %v851
    %861 = vmatprep.subr.mxu0 0.0
    %862 = vmatpush1.msra.mxu0 %v852
    %863 = vmatprep.subr.mxu0 0.0
    %864 = vmatpush1.msra.mxu0 0.0
    %865 = vmatprep.subr.mxu0 0.0
    %866 = vmatpush1.msra.mxu0 0.0
    %867 = vmatprep.subr.mxu0 0.0
    %868 = vmatpush1.msra.mxu0 0.0
    %869 = vmatprep.subr.mxu0 0.0
    %870 = vmatpush1.msra.mxu0 0.0
    %871 = vmatprep.subr.mxu0 0.0
    %872 = vmatpush1.msra.mxu0 0.0
    %873 = vmatprep.subr.mxu0 0.0
    %874 = vmatpush1.msra.mxu0 0.0
    %875 = vmatprep.subr.mxu0 0.0
    %876 = vmatpush1.msra.mxu0 0.0
    %877 = vmatprep.subr.mxu0 0.0
    %878 = vmatpush1.msra.mxu0 0.0
    %879 = vmatprep.subr.mxu0 0.0
    %880 = vmatpush1.msra.mxu0 0.0
    %881 = vmatprep.subr.mxu0 0.0
    %882 = vmatpush1.msra.mxu0 0.0
    %883 = vmatprep.subr.mxu0 0.0
    %884 = vmatpush1.msra.mxu0 0.0
    %885 = vmatprep.subr.mxu0 0.0
    %886 = vmatpush1.msra.mxu0 0.0
    %887 = vmatprep.subr.mxu0 0.0
    %888 = vmatpush1.msra.mxu0 0.0
    %889 = vmatprep.subr.mxu0 0.0
    %890 = vmatpush1.msra.mxu0 0.0
    %891 = vmatprep.subr.mxu0 0.0
    %892 = vmatpush1.msra.mxu0 0.0
    %893 = vmatprep.subr.mxu0 0.0
    %894 = vmatpush1.msra.mxu0 0.0
    %895 = vmatprep.subr.mxu0 0.0
    %896 = vmatpush1.msra.mxu0 0.0
    %897 = vmatprep.subr.mxu0 0.0
    %898 = vmatpush1.msra.mxu0 0.0
    %899 = vmatprep.subr.mxu0 0.0
    %900 = vmatpush1.msra.mxu0 0.0
    %901 = vmatprep.subr.mxu0 0.0
    %902 = vmatpush1.msra.mxu0 0.0
    %903 = vmatprep.subr.mxu0 0.0
    %904 = vmatpush1.msra.mxu0 0.0
    %905 = vmatprep.subr.mxu0 0.0
    %906 = vmatpush1.msra.mxu0 0.0
    %907 = vmatprep.subr.mxu0 0.0
    %908 = vmatpush1.msra.mxu0 0.0
    %909 = vmatprep.subr.mxu0 0.0
    %910 = vmatpush1.msra.mxu0 0.0
    %911 = vmatprep.subr.mxu0 0.0
    %912 = vmatpush1.msra.mxu0 0.0
    %913 = vmatprep.subr.mxu0 0.0
    %914 = vmatpush1.msra.mxu0 0.0
    %915 = vmatprep.subr.mxu0 0.0
    %916 = vmatpush1.msra.mxu0 0.0
    %917 = vmatprep.subr.mxu0 0.0
    %918 = vmatpush1.msra.mxu0 0.0
    %919 = vmatprep.subr.mxu0 0.0
    %920 = vmatpush1.msra.mxu0 0.0
    %921 = vmatprep.mubr.f32.mxu0 0.0
    %922 = vmatmul.mubr.f32.gmra.mrb[0].mxu0 %v141
    %v923 = vpop.f32.mrb[0].mxu0
    %v924 = vadd.f32 %v856, %v923
    %v925 = vpop.f32.mrb[0].mxu0
    %926 = vmatprep.mubr.f32.mxu0 0.0
    %927 = vmatmul.mubr.f32.gmra.mrb[0].mxu0 %v144
    %v928 = vpop.f32.mrb[0].mxu0
    %v929 = vadd.f32 %v856, %v928
    %v930 = vpop.f32.mrb[0].mxu0
    %931 = vmatprep.mubr.f32.mxu0 0.0
    %932 = vmatmul.mubr.f32.gmra.mrb[0].mxu0 %v147
    %v933 = vpop.f32.mrb[0].mxu0
    %v934 = vadd.f32 %v856, %v933
    %v935 = vpop.f32.mrb[0].mxu0
    %936 = vmatprep.mubr.f32.mxu0 0.0
    %937 = vmatmul.mubr.f32.gmra.mrb[0].mxu0 %v150
    %v938 = vpop.f32.mrb[0].mxu0
    %v939 = vadd.f32 %v856, %v938
    %v940 = vpop.f32.mrb[0].mxu0
    %941 = vmatprep.mubr.f32.mxu0 0.0
    %942 = vmatmul.mubr.f32.gmra.mrb[0].mxu0 %v153
    %v943 = vpop.f32.mrb[0].mxu0
    %v944 = vadd.f32 %v856, %v943
    %v945 = vpop.f32.mrb[0].mxu0
    %946 = vmatprep.mubr.f32.mxu0 0.0
    %947 = vmatmul.mubr.f32.gmra.mrb[0].mxu0 %v156
    %v948 = vpop.f32.mrb[0].mxu0
    %v949 = vadd.f32 %v856, %v948
    %v950 = vpop.f32.mrb[0].mxu0
    %951 = vdwg.mxu0
    %v952 = vmax.f32 %v924, 0.0
    %v953 = vmax.f32 %v929, 0.0
    %v954 = vmax.f32 %v934, 0.0
    %v955 = vmax.f32 %v939, 0.0
    %v956 = vmax.f32 %v944, 0.0
    %v957 = vmax.f32 %v949, 0.0
    %v958 = vadd.f32 %v952, 1e-07
    %v959 = vadd.f32 %v953, 1e-07
    %v960 = vadd.f32 %v954, 1e-07
    %v961 = vadd.f32 %v955, 1e-07
    %v962 = vadd.f32 %v956, 1e-07
    %v963 = vadd.f32 %v957, 1e-07
    %964 = vmatprep.subr.mxu0 0.0
    %965 = vmatpush1.msra.mxu0 %v958
    %966 = vmatprep.subr.mxu0 0.0
    %967 = vmatpush1.msra.mxu0 %v959
    %968 = vmatprep.subr.mxu0 0.0
    %969 = vmatpush1.msra.mxu0 %v960
    %970 = vmatprep.subr.mxu0 0.0
    %971 = vmatpush1.msra.mxu0 %v961
    %972 = vmatprep.subr.mxu0 0.0
    %973 = vmatpush1.msra.mxu0 %v962
    %974 = vmatprep.subr.mxu0 0.0
    %975 = vmatpush1.msra.mxu0 %v963
    %976 = vmatprep.subr.mxu0 0.0
    %977 = vmatpush1.msra.mxu0 0.0
    %978 = vmatprep.subr.mxu0 0.0
    %979 = vmatpush1.msra.mxu0 0.0
    %980 = vmatprep.subr.mxu0 0.0
    %981 = vmatpush1.msra.mxu0 0.0
    %982 = vmatprep.subr.mxu0 0.0
    %983 = vmatpush1.msra.mxu0 0.0
    %984 = vmatprep.subr.mxu0 0.0
    %985 = vmatpush1.msra.mxu0 0.0
    %986 = vmatprep.subr.mxu0 0.0
    %987 = vmatpush1.msra.mxu0 0.0
    %988 = vmatprep.subr.mxu0 0.0
    %989 = vmatpush1.msra.mxu0 0.0
    %990 = vmatprep.subr.mxu0 0.0
    %991 = vmatpush1.msra.mxu0 0.0
    %992 = vmatprep.subr.mxu0 0.0
    %993 = vmatpush1.msra.mxu0 0.0
    %994 = vmatprep.subr.mxu0 0.0
    %995 = vmatpush1.msra.mxu0 0.0
    %996 = vmatprep.subr.mxu0 0.0
    %997 = vmatpush1.msra.mxu0 0.0
    %998 = vmatprep.subr.mxu0 0.0
    %999 = vmatpush1.msra.mxu0 0.0
    %1000 = vmatprep.subr.mxu0 0.0
    %1001 = vmatpush1.msra.mxu0 0.0
    %1002 = vmatprep.subr.mxu0 0.0
    %1003 = vmatpush1.msra.mxu0 0.0
    %1004 = vmatprep.subr.mxu0 0.0
    %1005 = vmatpush1.msra.mxu0 0.0
    %1006 = vmatprep.subr.mxu0 0.0
    %1007 = vmatpush1.msra.mxu0 0.0
    %1008 = vmatprep.subr.mxu0 0.0
    %1009 = vmatpush1.msra.mxu0 0.0
    %1010 = vmatprep.subr.mxu0 0.0
    %1011 = vmatpush1.msra.mxu0 0.0
    %1012 = vmatprep.subr.mxu0 0.0
    %1013 = vmatpush1.msra.mxu0 0.0
    %1014 = vmatprep.subr.mxu0 0.0
    %1015 = vmatpush1.msra.mxu0 0.0
    %1016 = vmatprep.subr.mxu0 0.0
    %1017 = vmatpush1.msra.mxu0 0.0
    %1018 = vmatprep.subr.mxu0 0.0
    %1019 = vmatpush1.msra.mxu0 0.0
    %1020 = vmatprep.subr.mxu0 0.0
    %1021 = vmatpush1.msra.mxu0 0.0
    %1022 = vmatprep.subr.mxu0 0.0
    %1023 = vmatpush1.msra.mxu0 0.0
    %1024 = vmatprep.subr.mxu0 0.0
    %1025 = vmatpush1.msra.mxu0 0.0
    %1026 = vmatprep.subr.mxu0 0.0
    %1027 = vmatpush1.msra.mxu0 0.0
    %1028 = vmatprep.mubr.f32.mxu0 0.0
    %1029 = vmatmul.mubr.f32.gmra.mrb[0].mxu0 %v267
    %v1030 = vpop.f32.mrb[0].mxu0
    %v1031 = vadd.f32 0.0, %v1030
    %v1032 = vpop.f32.mrb[0].mxu0
    %1033 = vmatprep.mubr.f32.mxu0 0.0
    %1034 = vmatmul.mubr.f32.gmra.mrb[0].mxu0 %v270
    %v1035 = vpop.f32.mrb[0].mxu0
    %v1036 = vadd.f32 0.0, %v1035
    %v1037 = vpop.f32.mrb[0].mxu0
    %1038 = vmatprep.mubr.f32.mxu0 0.0
    %1039 = vmatmul.mubr.f32.gmra.mrb[0].mxu0 %v273
    %v1040 = vpop.f32.mrb[0].mxu0
    %v1041 = vadd.f32 0.0, %v1040
    %v1042 = vpop.f32.mrb[0].mxu0
    %1043 = vdwg.mxu0
    %v1044 = vadd.f32 %v850, %v1031
    %v1045 = vadd.f32 %v851, %v1036
    %v1046 = vadd.f32 %v852, %v1041
    %s1047 = scalar_lea.vmem %s5, 256
    %v1048 = vld [vmem:[%s1047] sm:$0xff]
    %v1049 = vld [vmem:[%s1047 + $0x8] sm:$0xff]
    %v1050 = vld [vmem:[%s1047 + $0x10] sm:$0xff]
    %v1051 = vld [vmem:[%s1047 + $0x18] sm:$0xff]
    %v1052 = vld [vmem:[%s1047 + $0x20] sm:$0xff]
    %v1053 = vld [vmem:[%s1047 + $0x28] sm:$0xff]
    %v1054 = vld [vmem:[%s1047 + $0x30] sm:$0xff]
    %v1055 = vld [vmem:[%s1047 + $0x38] sm:$0xff]
    %v1056 = vld [vmem:[%s1047 + $0x40] sm:$0xff]
    %v1057 = vld [vmem:[%s1047 + $0x48] sm:$0xff]
    %v1058 = vld [vmem:[%s1047 + $0x50] sm:$0xff]
    %v1059 = vld [vmem:[%s1047 + $0x58] sm:$0xff]
    %v1060 = vld [vmem:[%s1047 + $0x60] sm:$0xff]
    %v1061 = vld [vmem:[%s1047 + $0x68] sm:$0xff]
    %v1062 = vld [vmem:[%s1047 + $0x70] sm:$0xff]
    %v1063 = vld [vmem:[%s1047 + $0x78] sm:$0xff]
    %v1064 = vlaneseq
    %v1065 = vshrl.u32 %v1064, 7
    %v1066 = vsub.s32 0, %v1065
    %v1067 = vrot.slane %v809, %v1066
    %1068 = vmatprep.subr.mxu0 0.0
    %1069 = vmatpush1.msra.mxu0 %v1048
    %1070 = vmatprep.subr.mxu0 0.0
    %1071 = vmatpush1.msra.mxu0 %v1049
    %1072 = vmatprep.subr.mxu0 0.0
    %1073 = vmatpush1.msra.mxu0 %v1050
    %1074 = vmatprep.subr.mxu0 0.0
    %1075 = vmatpush1.msra.mxu0 %v1051
    %1076 = vmatprep.subr.mxu0 0.0
    %1077 = vmatpush1.msra.mxu0 %v1052
    %1078 = vmatprep.subr.mxu0 0.0
    %1079 = vmatpush1.msra.mxu0 %v1053
    %1080 = vmatprep.subr.mxu0 0.0
    %1081 = vmatpush1.msra.mxu0 %v1054
    %1082 = vmatprep.subr.mxu0 0.0
    %1083 = vmatpush1.msra.mxu0 %v1055
    %1084 = vmatprep.subr.mxu0 0.0
    %1085 = vmatpush1.msra.mxu0 %v1056
    %1086 = vmatprep.subr.mxu0 0.0
    %1087 = vmatpush1.msra.mxu0 %v1057
    %1088 = vmatprep.subr.mxu0 0.0
    %1089 = vmatpush1.msra.mxu0 %v1058
    %1090 = vmatprep.subr.mxu0 0.0
    %1091 = vmatpush1.msra.mxu0 %v1059
    %1092 = vmatprep.subr.mxu0 0.0
    %1093 = vmatpush1.msra.mxu0 %v1060
    %1094 = vmatprep.subr.mxu0 0.0
    %1095 = vmatpush1.msra.mxu0 %v1061
    %1096 = vmatprep.subr.mxu0 0.0
    %1097 = vmatpush1.msra.mxu0 %v1062
    %1098 = vmatprep.subr.mxu0 0.0
    %1099 = vmatpush1.msra.mxu0 %v1063
    %1100 = vmatprep.subr.mxu0 0.0
    %1101 = vmatpush1.msra.mxu0 0.0
    %1102 = vmatprep.subr.mxu0 0.0
    %1103 = vmatpush1.msra.mxu0 0.0
    %1104 = vmatprep.subr.mxu0 0.0
    %1105 = vmatpush1.msra.mxu0 0.0
    %1106 = vmatprep.subr.mxu0 0.0
    %1107 = vmatpush1.msra.mxu0 0.0
    %1108 = vmatprep.subr.mxu0 0.0
    %1109 = vmatpush1.msra.mxu0 0.0
    %1110 = vmatprep.subr.mxu0 0.0
    %1111 = vmatpush1.msra.mxu0 0.0
    %1112 = vmatprep.subr.mxu0 0.0
    %1113 = vmatpush1.msra.mxu0 0.0
    %1114 = vmatprep.subr.mxu0 0.0
    %1115 = vmatpush1.msra.mxu0 0.0
    %1116 = vmatprep.subr.mxu0 0.0
    %1117 = vmatpush1.msra.mxu0 0.0
    %1118 = vmatprep.subr.mxu0 0.0
    %1119 = vmatpush1.msra.mxu0 0.0
    %1120 = vmatprep.subr.mxu0 0.0
    %1121 = vmatpush1.msra.mxu0 0.0
    %1122 = vmatprep.subr.mxu0 0.0
    %1123 = vmatpush1.msra.mxu0 0.0
    %1124 = vmatprep.subr.mxu0 0.0
    %1125 = vmatpush1.msra.mxu0 0.0
    %1126 = vmatprep.subr.mxu0 0.0
    %1127 = vmatpush1.msra.mxu0 0.0
    %1128 = vmatprep.subr.mxu0 0.0
    %1129 = vmatpush1.msra.mxu0 0.0
    %1130 = vmatprep.subr.mxu0 0.0
    %1131 = vmatpush1.msra.mxu0 0.0
    %1132 = vmatprep.mubr.f32.mxu0 0.0
    %1133 = vmatmul.mubr.f32.gmra.mrb[0].mxu0 %v1044
    %v1134 = vpop.f32.mrb[0].mxu0
    %v1135 = vadd.f32 %v1067, %v1134
    %v1136 = vpop.f32.mrb[0].mxu0
    %1137 = vmatprep.mubr.f32.mxu0 0.0
    %1138 = vmatmul.mubr.f32.gmra.mrb[0].mxu0 %v1045
    %v1139 = vpop.f32.mrb[0].mxu0
    %v1140 = vadd.f32 %v1067, %v1139
    %v1141 = vpop.f32.mrb[0].mxu0
    %1142 = vmatprep.mubr.f32.mxu0 0.0
    %1143 = vmatmul.mubr.f32.gmra.mrb[0].mxu0 %v1046
    %v1144 = vpop.f32.mrb[0].mxu0
    %v1145 = vadd.f32 %v1067, %v1144
    %v1146 = vpop.f32.mrb[0].mxu0
    %1147 = vdwg.mxu0
    %v1148 = vmax.f32 %v1135, 0.0
    %v1149 = vmax.f32 %v1140, 0.0
    %v1150 = vmax.f32 %v1145, 0.0
    %v1152 = vsel %vm139, %v83, 0
    %1154 = vmatprep.subr.mxu0 0.0
    %1155 = vmatpush1.msra.mxu0 %v1148
    %1156 = vmatprep.subr.mxu0 0.0
    %1157 = vmatpush1.msra.mxu0 %v1149
    %1158 = vmatprep.subr.mxu0 0.0
    %1159 = vmatpush1.msra.mxu0 %v1150
    %1160 = vmatprep.subr.mxu0 0.0
    %1161 = vmatpush1.msra.mxu0 0.0
    %1162 = vmatprep.subr.mxu0 0.0
    %1163 = vmatpush1.msra.mxu0 0.0
    %1164 = vmatprep.subr.mxu0 0.0
    %1165 = vmatpush1.msra.mxu0 0.0
    %1166 = vmatprep.subr.mxu0 0.0
    %1167 = vmatpush1.msra.mxu0 0.0
    %1168 = vmatprep.subr.mxu0 0.0
    %1169 = vmatpush1.msra.mxu0 0.0
    %1170 = vmatprep.subr.mxu0 0.0
    %1171 = vmatpush1.msra.mxu0 0.0
    %1172 = vmatprep.subr.mxu0 0.0
    %1173 = vmatpush1.msra.mxu0 0.0
    %1174 = vmatprep.subr.mxu0 0.0
    %1175 = vmatpush1.msra.mxu0 0.0
    %1176 = vmatprep.subr.mxu0 0.0
    %1177 = vmatpush1.msra.mxu0 0.0
    %1178 = vmatprep.subr.mxu0 0.0
    %1179 = vmatpush1.msra.mxu0 0.0
    %1180 = vmatprep.subr.mxu0 0.0
    %1181 = vmatpush1.msra.mxu0 0.0
    %1182 = vmatprep.subr.mxu0 0.0
    %1183 = vmatpush1.msra.mxu0 0.0
    %1184 = vmatprep.subr.mxu0 0.0
    %1185 = vmatpush1.msra.mxu0 0.0
    %1186 = vmatprep.subr.mxu0 0.0
    %1187 = vmatpush1.msra.mxu0 0.0
    %1188 = vmatprep.subr.mxu0 0.0
    %1189 = vmatpush1.msra.mxu0 0.0
    %1190 = vmatprep.subr.mxu0 0.0
    %1191 = vmatpush1.msra.mxu0 0.0
    %1192 = vmatprep.subr.mxu0 0.0
    %1193 = vmatpush1.msra.mxu0 0.0
    %1194 = vmatprep.subr.mxu0 0.0
    %1195 = vmatpush1.msra.mxu0 0.0
    %1196 = vmatprep.subr.mxu0 0.0
    %1197 = vmatpush1.msra.mxu0 0.0
    %1198 = vmatprep.subr.mxu0 0.0
    %1199 = vmatpush1.msra.mxu0 0.0
    %1200 = vmatprep.subr.mxu0 0.0
    %1201 = vmatpush1.msra.mxu0 0.0
    %1202 = vmatprep.subr.mxu0 0.0
    %1203 = vmatpush1.msra.mxu0 0.0
    %1204 = vmatprep.subr.mxu0 0.0
    %1205 = vmatpush1.msra.mxu0 0.0
    %1206 = vmatprep.subr.mxu0 0.0
    %1207 = vmatpush1.msra.mxu0 0.0
    %1208 = vmatprep.subr.mxu0 0.0
    %1209 = vmatpush1.msra.mxu0 0.0
    %1210 = vmatprep.subr.mxu0 0.0
    %1211 = vmatpush1.msra.mxu0 0.0
    %1212 = vmatprep.subr.mxu0 0.0
    %1213 = vmatpush1.msra.mxu0 0.0
    %1214 = vmatprep.subr.mxu0 0.0
    %1215 = vmatpush1.msra.mxu0 0.0
    %1216 = vmatprep.subr.mxu0 0.0
    %1217 = vmatpush1.msra.mxu0 0.0
    %1218 = vmatprep.mubr.f32.mxu0 0.0
    %1219 = vmatmul.mubr.f32.gmra.mrb[0].mxu0 %v1152
    %v1220 = vpop.f32.mrb[0].mxu0
    %v1221 = vadd.f32 0.0, %v1220
    %v1222 = vpop.f32.mrb[0].mxu0
    %1223 = vdwg.mxu0
    %v1224 = vld [vmem:[%s4 + $0xc] sm:$0x1]
    %v1225 = vld [vmem:[%s4 + $0xd] sm:$0x1]
    %v1226 = vld [vmem:[%s4 + $0xe] sm:$0x1]
    %vm1227 = vcmask 1043456
    %v1228 = vsel %vm1227, %v1221, 0.0
    %v1229 = vrot.slane %v1228, 4
    %v1230 = vadd.f32 %v1228, %v1229
    %v1231 = vrot.slane %v1230, 2
    %v1232 = vadd.f32 %v1230, %v1231
    %v1233 = vrot.slane %v1232, 1
    %v1234 = vadd.f32 %v1232, %v1233
    %v1235 = vrcp.pop 4.0
    %v1236 = vmul.f32 %v1234, %v1235
    %v1237 = vsub.f32 %v1221, %v1236
    %v1238 = vmul.f32 %v1237, %v1237
    %v1239 = vsel %vm1227, %v1238, 0.0
    %v1240 = vrot.slane %v1239, 4
    %v1241 = vadd.f32 %v1239, %v1240
    %v1242 = vrot.slane %v1241, 2
    %v1243 = vadd.f32 %v1241, %v1242
    %v1244 = vrot.slane %v1243, 1
    %v1245 = vadd.f32 %v1243, %v1244
    %v1246 = vmul.f32 %v1245, %v1235
    %v1247 = vadd.f32 %v1246, 1e-05
    %v1248 = vrsqrt.pop %v1247
    %v1249 = vmul.f32 %v1237, %v1248
    %v1250 = vlaneseq
    %v1251 = vshrl.u32 %v1250, 7
    %v1252 = vsub.s32 0, %v1251
    %v1253 = vrot.slane %v1224, %v1252
    %v1254 = vmul.f32 %v1249, %v1253
    %v1255 = vlaneseq
    %v1256 = vshrl.u32 %v1255, 7
    %v1257 = vsub.s32 0, %v1256
    %v1258 = vrot.slane %v1225, %v1257
    %v1259 = vadd.f32 %v1254, %v1258
    %s1260 = scalar_lea.vmem %s5, 384
    %v1261 = vld [vmem:[%s1260] sm:$0xff]
    %v1262 = vld [vmem:[%s1260 + $0x8] sm:$0xff]
    %v1263 = vld [vmem:[%s1260 + $0x10] sm:$0xff]
    %v1264 = vld [vmem:[%s1260 + $0x18] sm:$0xff]
    %v1265 = vld [vmem:[%s1260 + $0x20] sm:$0xff]
    %v1266 = vld [vmem:[%s1260 + $0x28] sm:$0xff]
    %v1267 = vld [vmem:[%s1260 + $0x30] sm:$0xff]
    %v1268 = vld [vmem:[%s1260 + $0x38] sm:$0xff]
    %v1269 = vld [vmem:[%s1260 + $0x40] sm:$0xff]
    %v1270 = vld [vmem:[%s1260 + $0x48] sm:$0xff]
    %v1271 = vld [vmem:[%s1260 + $0x50] sm:$0xff]
    %v1272 = vld [vmem:[%s1260 + $0x58] sm:$0xff]
    %v1273 = vld [vmem:[%s1260 + $0x60] sm:$0xff]
    %v1274 = vld [vmem:[%s1260 + $0x68] sm:$0xff]
    %v1275 = vld [vmem:[%s1260 + $0x70] sm:$0xff]
    %v1276 = vld [vmem:[%s1260 + $0x78] sm:$0xff]
    %v1277 = vlaneseq
    %v1278 = vshrl.u32 %v1277, 7
    %v1279 = vsub.s32 0, %v1278
    %v1280 = vrot.slane %v1226, %v1279
    %1281 = vmatprep.subr.mxu0 0.0
    %1282 = vmatpush1.msra.mxu0 %v1261
    %1283 = vmatprep.subr.mxu0 0.0
    %1284 = vmatpush1.msra.mxu0 %v1262
    %1285 = vmatprep.subr.mxu0 0.0
    %1286 = vmatpush1.msra.mxu0 %v1263
    %1287 = vmatprep.subr.mxu0 0.0
    %1288 = vmatpush1.msra.mxu0 %v1264
    %1289 = vmatprep.subr.mxu0 0.0
    %1290 = vmatpush1.msra.mxu0 %v1265
    %1291 = vmatprep.subr.mxu0 0.0
    %1292 = vmatpush1.msra.mxu0 %v1266
    %1293 = vmatprep.subr.mxu0 0.0
    %1294 = vmatpush1.msra.mxu0 %v1267
    %1295 = vmatprep.subr.mxu0 0.0
    %1296 = vmatpush1.msra.mxu0 %v1268
    %1297 = vmatprep.subr.mxu0 0.0
    %1298 = vmatpush1.msra.mxu0 %v1269
    %1299 = vmatprep.subr.mxu0 0.0
    %1300 = vmatpush1.msra.mxu0 %v1270
    %1301 = vmatprep.subr.mxu0 0.0
    %1302 = vmatpush1.msra.mxu0 %v1271
    %1303 = vmatprep.subr.mxu0 0.0
    %1304 = vmatpush1.msra.mxu0 %v1272
    %1305 = vmatprep.subr.mxu0 0.0
    %1306 = vmatpush1.msra.mxu0 %v1273
    %1307 = vmatprep.subr.mxu0 0.0
    %1308 = vmatpush1.msra.mxu0 %v1274
    %1309 = vmatprep.subr.mxu0 0.0
    %1310 = vmatpush1.msra.mxu0 %v1275
    %1311 = vmatprep.subr.mxu0 0.0
    %1312 = vmatpush1.msra.mxu0 %v1276
    %1313 = vmatprep.subr.mxu0 0.0
    %1314 = vmatpush1.msra.mxu0 0.0
    %1315 = vmatprep.subr.mxu0 0.0
    %1316 = vmatpush1.msra.mxu0 0.0
    %1317 = vmatprep.subr.mxu0 0.0
    %1318 = vmatpush1.msra.mxu0 0.0
    %1319 = vmatprep.subr.mxu0 0.0
    %1320 = vmatpush1.msra.mxu0 0.0
    %1321 = vmatprep.subr.mxu0 0.0
    %1322 = vmatpush1.msra.mxu0 0.0
    %1323 = vmatprep.subr.mxu0 0.0
    %1324 = vmatpush1.msra.mxu0 0.0
    %1325 = vmatprep.subr.mxu0 0.0
    %1326 = vmatpush1.msra.mxu0 0.0
    %1327 = vmatprep.subr.mxu0 0.0
    %1328 = vmatpush1.msra.mxu0 0.0
    %1329 = vmatprep.subr.mxu0 0.0
    %1330 = vmatpush1.msra.mxu0 0.0
    %1331 = vmatprep.subr.mxu0 0.0
    %1332 = vmatpush1.msra.mxu0 0.0
    %1333 = vmatprep.subr.mxu0 0.0
    %1334 = vmatpush1.msra.mxu0 0.0
    %1335 = vmatprep.subr.mxu0 0.0
    %1336 = vmatpush1.msra.mxu0 0.0
    %1337 = vmatprep.subr.mxu0 0.0
    %1338 = vmatpush1.msra.mxu0 0.0
    %1339 = vmatprep.subr.mxu0 0.0
    %1340 = vmatpush1.msra.mxu0 0.0
    %1341 = vmatprep.subr.mxu0 0.0
    %1342 = vmatpush1.msra.mxu0 0.0
    %1343 = vmatprep.subr.mxu0 0.0
    %1344 = vmatpush1.msra.mxu0 0.0
    %1345 = vmatprep.mubr.f32.mxu0 0.0
    %1346 = vmatmul.mubr.f32.gmra.mrb[0].mxu0 %v1259
    %v1347 = vpop.f32.mrb[0].mxu0
    %v1348 = vadd.f32 %v1280, %v1347
    %v1349 = vpop.f32.mrb[0].mxu0
    %1350 = vdwg.mxu0
    %v1351 = vmax.f32 %v1348, 0.0
    %v1352 = vld [vmem:[%s4 + $0xf] sm:$0x1]
    %v1353 = vld [vmem:[%s4 + $0x10] sm:$0x1]
    %v1354 = vsel %vm1227, %v1351, 0.0
    %v1355 = vrot.slane %v1354, 4
    %v1356 = vadd.f32 %v1354, %v1355
    %v1357 = vrot.slane %v1356, 2
    %v1358 = vadd.f32 %v1356, %v1357
    %v1359 = vrot.slane %v1358, 1
    %v1360 = vadd.f32 %v1358, %v1359
    %v1361 = vmul.f32 %v1360, %v1235
    %v1362 = vsub.f32 %v1351, %v1361
    %v1363 = vmul.f32 %v1362, %v1362
    %v1364 = vsel %vm1227, %v1363, 0.0
    %v1365 = vrot.slane %v1364, 4
    %v1366 = vadd.f32 %v1364, %v1365
    %v1367 = vrot.slane %v1366, 2
    %v1368 = vadd.f32 %v1366, %v1367
    %v1369 = vrot.slane %v1368, 1
    %v1370 = vadd.f32 %v1368, %v1369
    %v1371 = vmul.f32 %v1370, %v1235
    %v1372 = vadd.f32 %v1371, 1e-05
    %v1373 = vrsqrt.pop %v1372
    %v1374 = vmul.f32 %v1362, %v1373
    %v1375 = vlaneseq
    %v1376 = vshrl.u32 %v1375, 7
    %v1377 = vsub.s32 0, %v1376
    %v1378 = vrot.slane %v1352, %v1377
    %v1379 = vmul.f32 %v1374, %v1378
    %v1380 = vlaneseq
    %v1381 = vshrl.u32 %v1380, 7
    %v1382 = vsub.s32 0, %v1381
    %v1383 = vrot.slane %v1353, %v1382
    %v1384 = vadd.f32 %v1379, %v1383
    %v1385 = vld [vmem:[%s4 + $0x11] sm:$0x1]
    %s1386 = scalar_lea.vmem %s5, 512
    %v1387 = vld [vmem:[%s1386] sm:$0xff]
    %v1388 = vld [vmem:[%s1386 + $0x8] sm:$0xff]
    %v1389 = vld [vmem:[%s1386 + $0x10] sm:$0xff]
    %v1390 = vld [vmem:[%s1386 + $0x18] sm:$0xff]
    %v1391 = vld [vmem:[%s1386 + $0x20] sm:$0xff]
    %v1392 = vld [vmem:[%s1386 + $0x28] sm:$0xff]
    %v1393 = vld [vmem:[%s1386 + $0x30] sm:$0xff]
    %v1394 = vld [vmem:[%s1386 + $0x38] sm:$0xff]
    %v1395 = vld [vmem:[%s1386 + $0x40] sm:$0xff]
    %v1396 = vld [vmem:[%s1386 + $0x48] sm:$0xff]
    %v1397 = vld [vmem:[%s1386 + $0x50] sm:$0xff]
    %v1398 = vld [vmem:[%s1386 + $0x58] sm:$0xff]
    %v1399 = vld [vmem:[%s1386 + $0x60] sm:$0xff]
    %v1400 = vld [vmem:[%s1386 + $0x68] sm:$0xff]
    %v1401 = vld [vmem:[%s1386 + $0x70] sm:$0xff]
    %v1402 = vld [vmem:[%s1386 + $0x78] sm:$0xff]
    %v1403 = vlaneseq
    %v1404 = vshrl.u32 %v1403, 7
    %v1405 = vsub.s32 0, %v1404
    %v1406 = vrot.slane %v1385, %v1405
    %1407 = vmatprep.subr.mxu0 0.0
    %1408 = vmatpush1.msra.mxu0 %v1387
    %1409 = vmatprep.subr.mxu0 0.0
    %1410 = vmatpush1.msra.mxu0 %v1388
    %1411 = vmatprep.subr.mxu0 0.0
    %1412 = vmatpush1.msra.mxu0 %v1389
    %1413 = vmatprep.subr.mxu0 0.0
    %1414 = vmatpush1.msra.mxu0 %v1390
    %1415 = vmatprep.subr.mxu0 0.0
    %1416 = vmatpush1.msra.mxu0 %v1391
    %1417 = vmatprep.subr.mxu0 0.0
    %1418 = vmatpush1.msra.mxu0 %v1392
    %1419 = vmatprep.subr.mxu0 0.0
    %1420 = vmatpush1.msra.mxu0 %v1393
    %1421 = vmatprep.subr.mxu0 0.0
    %1422 = vmatpush1.msra.mxu0 %v1394
    %1423 = vmatprep.subr.mxu0 0.0
    %1424 = vmatpush1.msra.mxu0 %v1395
    %1425 = vmatprep.subr.mxu0 0.0
    %1426 = vmatpush1.msra.mxu0 %v1396
    %1427 = vmatprep.subr.mxu0 0.0
    %1428 = vmatpush1.msra.mxu0 %v1397
    %1429 = vmatprep.subr.mxu0 0.0
    %1430 = vmatpush1.msra.mxu0 %v1398
    %1431 = vmatprep.subr.mxu0 0.0
    %1432 = vmatpush1.msra.mxu0 %v1399
    %1433 = vmatprep.subr.mxu0 0.0
    %1434 = vmatpush1.msra.mxu0 %v1400
    %1435 = vmatprep.subr.mxu0 0.0
    %1436 = vmatpush1.msra.mxu0 %v1401
    %1437 = vmatprep.subr.mxu0 0.0
    %1438 = vmatpush1.msra.mxu0 %v1402
    %1439 = vmatprep.subr.mxu0 0.0
    %1440 = vmatpush1.msra.mxu0 0.0
    %1441 = vmatprep.subr.mxu0 0.0
    %1442 = vmatpush1.msra.mxu0 0.0
    %1443 = vmatprep.subr.mxu0 0.0
    %1444 = vmatpush1.msra.mxu0 0.0
    %1445 = vmatprep.subr.mxu0 0.0
    %1446 = vmatpush1.msra.mxu0 0.0
    %1447 = vmatprep.subr.mxu0 0.0
    %1448 = vmatpush1.msra.mxu0 0.0
    %1449 = vmatprep.subr.mxu0 0.0
    %1450 = vmatpush1.msra.mxu0 0.0
    %1451 = vmatprep.subr.mxu0 0.0
    %1452 = vmatpush1.msra.mxu0 0.0
    %1453 = vmatprep.subr.mxu0 0.0
    %1454 = vmatpush1.msra.mxu0 0.0
    %1455 = vmatprep.subr.mxu0 0.0
    %1456 = vmatpush1.msra.mxu0 0.0
    %1457 = vmatprep.subr.mxu0 0.0
    %1458 = vmatpush1.msra.mxu0 0.0
    %1459 = vmatprep.subr.mxu0 0.0
    %1460 = vmatpush1.msra.mxu0 0.0
    %1461 = vmatprep.subr.mxu0 0.0
    %1462 = vmatpush1.msra.mxu0 0.0
    %1463 = vmatprep.subr.mxu0 0.0
    %1464 = vmatpush1.msra.mxu0 0.0
    %1465 = vmatprep.subr.mxu0 0.0
    %1466 = vmatpush1.msra.mxu0 0.0
    %1467 = vmatprep.subr.mxu0 0.0
    %1468 = vmatpush1.msra.mxu0 0.0
    %1469 = vmatprep.subr.mxu0 0.0
    %1470 = vmatpush1.msra.mxu0 0.0
    %1471 = vmatprep.mubr.f32.mxu0 0.0
    %1472 = vmatmul.mubr.f32.gmra.mrb[0].mxu0 %v1384
    %v1473 = vpop.f32.mrb[0].mxu0
    %v1474 = vadd.f32 %v1406, %v1473
    %v1475 = vpop.f32.mrb[0].mxu0
    %1476 = vdwg.mxu0
    %v1477 = vsel %vm1227, %v1474, -inf
    %1478 = vmax.xlane.f32.xlu0 %v1477
    %v1479 = vpop.xlane.xlu0 %1478
    %v1480 = vsub.f32 %v1474, %v1479
    %v1481 = vmul.f32 %v1480, 1.442695
    %v1482 = vpow.pop %v1481
    %v1483 = vsel %vm1227, %v1482, 0.0
    %1484 = vadd.xlane.f32.xlu0 %v1483
    %v1485 = vpop.xlane.xlu0 %1484
    %v1486 = vlog2.pop %v1485
    %v1487 = vmul.f32 %v1486, 0.6931472
    %v1488 = vsub.f32 %v1480, %v1487
    %1489 = vst [vmem:[#allocation2] sm:$0xf] %v1488
    // Predicated region
    $region26: #{gnn_forward.1} parent=1 // pred_check
      _
    $region27: #{gnn_forward.1} parent=1 // pred_check_branch
      %1491 = sbr.rel (0) target = $region29
    $region28: #{gnn_forward.1} parent=1 // pred_region
      %s1493 = ssub.s32 64, 64
      %1494 = vsyncadd [#allocation3], %s1493
      %s1496 = sshll.u32 [#allocation2], 4
      %s1497 = int_to_ptr.vmem [resolvable:$true] %s1496
      %1499 = dma.vmem_to_hbm [thread:$0]  %s1497, 64, %s6, [#allocation3]
    $region29: #{gnn_forward.1} parent=1 // pred_fallthru
      _
    // Predicated region
    $region30: #{gnn_forward.1} parent=1 // pred_check
      _
    $region31: #{gnn_forward.1} parent=1 // pred_check_branch
      %1501 = sbr.rel (0) target = $region33
    $region32: #{gnn_forward.1} parent=1 // pred_region
      %1502 = dma.done [#allocation3], 64
    $region33: #{gnn_forward.1} parent=1 // pred_fallthru
      _
    %1503 = vsyncpa [#allocation3], 1

</llo_original>
